<compile_context>
chip_gen: v7x
topology: tpu7x:2x2x1
jax: 0.10.0
libtpu: 0.0.40
codegen_flags: <defaults>
</compile_context>

<pallas_src>
import math

import jax
import jax.numpy as jnp
import numpy as np
from jax.experimental import pallas as pl
from jax.experimental.pallas import tpu as pltpu

# ---------------- problem sizes (small, consistent with the module) ----------
B = 2          # batch
T1 = 8         # query time
T2 = 16        # key/value time
N_FEAT = 32    # model dim
N_HEAD = 4     # heads
D_K = N_FEAT // N_HEAD   # 8
INNER = N_HEAD * D_K     # == N_FEAT for plain MHA

_NEG_LARGE = -1e30       # finite "minus infinity" (NaN-safe for all-masked rows)


# ---------------- Pallas kernel ----------------------------------------------
def cross_attn_kernel(lengths_ref,                               # SMEM prefetch (B,)
                      q_in_ref, k_in_ref, v_in_ref,              # per-batch activations
                      w_qkv_ref, b_qkv_ref, wo_ref, bo_ref,      # weights (replicated)
                      out_ref, kproj_ref, vproj_ref,             # outputs
                      x_all_ref):                                # VMEM scratch
    b = pl.program_id(0)

    # ---- stack the three input slabs into one row block (sublane-aligned) ----
    x_all_ref[0:T1, :] = q_in_ref[0]                 # rows  0:8
    x_all_ref[T1:T1 + T2, :] = k_in_ref[0]           # rows  8:24
    x_all_ref[T1 + T2:T1 + 2 * T2, :] = v_in_ref[0]  # rows 24:40

    # ---- fused Q/K/V projection: one MXU push ---------------------------------
    # (T1+2*T2, F) @ (F, 3*INNER) + b ; the extra off-diagonal products are
    # free at this size (all of it is a tiny fraction of one MXU tile).
    proj = jnp.dot(x_all_ref[...], w_qkv_ref[...],
                   preferred_element_type=jnp.float32) + b_qkv_ref[0]
    q = proj[:T1, 0:INNER]                                   # (T1, INNER)
    k = proj[T1:T1 + T2, INNER:2 * INNER]                    # (T2, INNER)
    v = proj[T1 + T2:T1 + 2 * T2, 2 * INNER:3 * INNER]       # (T2, INNER)

    # cache outputs (time-major); wrapper reshapes to (B, H, T2, d_k)
    kproj_ref[0] = k.astype(kproj_ref.dtype)
    vproj_ref[0] = v.astype(vproj_ref.dtype)

    # ---- mask as a single additive bias (hoisted out of the head loop) --------
    valid_len = lengths_ref[b]                                          # SMEM scalar
    col = jax.lax.broadcasted_iota(jnp.int32, (T1, T2), 1)
    bias = jnp.where(col < valid_len, 0.0, _NEG_LARGE).astype(jnp.float32)

    # fold 1/sqrt(d_k) into q once
    q = q * (1.0 / math.sqrt(D_K))

    # ---- per-head attention with the output projection folded in --------------
    acc = jnp.zeros((T1, N_FEAT), jnp.float32)
    for h in range(N_HEAD):
        sl = slice(h * D_K, (h + 1) * D_K)
        qh = q[:, sl]                                    # (T1, D_K)
        kh = k[:, sl]                                    # (T2, D_K)
        vh = v[:, sl]                                    # (T2, D_K)

        # scores: contract the d_k axis of q and k (no explicit transpose)
        s = jax.lax.dot_general(qh, kh, (((1,), (1,)), ((), ())),
                                preferred_element_type=jnp.float32) + bias
        m = jnp.max(s, axis=-1, keepdims=True)
        p = jnp.exp(s - m)                               # masked cols underflow to 0
        p = p * pl.reciprocal(jnp.sum(p, axis=-1, keepdims=True), approx=True)

        ctx_h = jnp.dot(p, vh, preferred_element_type=jnp.float32)      # (T1, D_K)
        acc = acc + jnp.dot(ctx_h, wo_ref[sl, :],
                            preferred_element_type=jnp.float32)         # (T1, F)

    out_ref[0] = (acc + bo_ref[0]).astype(out_ref.dtype)


def cross_attention(query, key, value, mask, params):
    """query: (B,T1,F), key/value: (B,T2,F), mask: (B,1,T2) float {0,1} padding mask.

    Returns (output (B,T1,F), new_cache=(k, v) with shape (B, H, T2, d_k)),
    matching the torch forward (eval mode, empty incoming cache).
    """
    (wq, bq, wk, bk, wv, bv, wo, bo) = params
    Bq, t1, F = query.shape
    _, t2, _ = key.shape

    # Combined QKV weight/bias (constant-folded under jit).
    w_qkv = jnp.concatenate([wq, wk, wv], axis=1)       # (F, 3*INNER)
    b_qkv = jnp.concatenate([bq, bk, bv], axis=1)       # (1, 3*INNER)

    # Contiguous padding mask -> per-batch valid lengths (scalar prefetch, SMEM).
    lengths = jnp.sum(mask[:, 0, :], axis=-1).astype(jnp.int32)    # (B,)

    out, k_proj, v_proj = pl.pallas_call(
        cross_attn_kernel,
        out_shape=(
            jax.ShapeDtypeStruct((Bq, t1, F), jnp.float32),
            jax.ShapeDtypeStruct((Bq, t2, INNER), jnp.float32),
            jax.ShapeDtypeStruct((Bq, t2, INNER), jnp.float32),
        ),
        grid_spec=pltpu.PrefetchScalarGridSpec(
            num_scalar_prefetch=1,
            grid=(Bq,),
            in_specs=[
                pl.BlockSpec((1, t1, F), lambda b, lens: (b, 0, 0)),        # query
                pl.BlockSpec((1, t2, F), lambda b, lens: (b, 0, 0)),        # key
                pl.BlockSpec((1, t2, F), lambda b, lens: (b, 0, 0)),        # value
                pl.BlockSpec((F, 3 * INNER), lambda b, lens: (0, 0)),       # [Wq|Wk|Wv]
                pl.BlockSpec((1, 3 * INNER), lambda b, lens: (0, 0)),       # [bq|bk|bv]
                pl.BlockSpec((INNER, F), lambda b, lens: (0, 0)),           # Wo
                pl.BlockSpec((1, F), lambda b, lens: (0, 0)),               # bo
            ],
            out_specs=(
                pl.BlockSpec((1, t1, F), lambda b, lens: (b, 0, 0)),        # output
                pl.BlockSpec((1, t2, INNER), lambda b, lens: (b, 0, 0)),    # k cache
                pl.BlockSpec((1, t2, INNER), lambda b, lens: (b, 0, 0)),    # v cache
            ),
            scratch_shapes=[pltpu.VMEM((t1 + 2 * t2, F), jnp.float32)],
        ),
        compiler_params=pltpu.CompilerParams(
            dimension_semantics=("parallel",)),
    )(lengths, query, key, value, w_qkv, b_qkv, wo, bo)

    # new_cache = (k, v) in torch layout (B, h, T2, d_k): cheap reshape/transpose
    # of the kernel outputs (no recomputed projections).
    k_cache = k_proj.reshape(Bq, t2, N_HEAD, D_K).transpose(0, 2, 1, 3)
    v_cache = v_proj.reshape(Bq, t2, N_HEAD, D_K).transpose(0, 2, 1, 3)
    return out, (k_cache, v_cache)


# ---------------- pure-JAX reference (mirrors the torch forward) -------------
def reference_forward(query, key, value, mask, params):
    (wq, bq, wk, bk, wv, bv, wo, bo) = params
    Bq, t1, F = query.shape
    _, t2, _ = key.shape
    q = (query @ wq + bq).reshape(Bq, t1, N_HEAD, D_K).transpose(0, 2, 1, 3)
    k = (key @ wk + bk).reshape(Bq, t2, N_HEAD, D_K).transpose(0, 2, 1, 3)
    v = (value @ wv + bv).reshape(Bq, t2, N_HEAD, D_K).transpose(0, 2, 1, 3)
    scores = jnp.einsum("bhqd,bhkd->bhqk", q, k) / math.sqrt(D_K)
    m = (mask[:, None, :, :] == 0.0)                        # (B,1,1,T2)
    scores = jnp.where(m, -jnp.inf, scores)
    attn = jax.nn.softmax(scores.astype(jnp.float32), axis=-1)
    attn = jnp.where(m, 0.0, attn)
    x = jnp.einsum("bhqk,bhkd->bhqd", attn, v)
    x = x.transpose(0, 2, 1, 3).reshape(Bq, t1, INNER)
    return x @ wo + bo


# ---------------- deterministic parameter init --------------------------------
def init_params(key):
    ks = jax.random.split(key, 8)
    s_in = 1.0 / math.sqrt(N_FEAT)
    s_out = 1.0 / math.sqrt(INNER)
    wq = jax.random.uniform(ks[0], (N_FEAT, INNER), jnp.float32, -s_in, s_in)
    bq = jax.random.uniform(ks[1], (1, INNER), jnp.float32, -s_in, s_in)
    wk = jax.random.uniform(ks[2], (N_FEAT, INNER), jnp.float32, -s_in, s_in)
    bk = jax.random.uniform(ks[3], (1, INNER), jnp.float32, -s_in, s_in)
    wv = jax.random.uniform(ks[4], (N_FEAT, INNER), jnp.float32, -s_in, s_in)
    bv = jax.random.uniform(ks[5], (1, INNER), jnp.float32, -s_in, s_in)
    wo = jax.random.uniform(ks[6], (INNER, N_FEAT), jnp.float32, -s_out, s_out)
    bo = jax.random.uniform(ks[7], (1, N_FEAT), jnp.float32, -s_out, s_out)
    return (wq, bq, wk, bk, wv, bv, wo, bo)


if __name__ == "__main__":
    root = jax.random.PRNGKey(0)
    kp, kq, kk, kv = jax.random.split(root, 4)

    params = init_params(kp)
    query = jax.random.normal(kq, (B, T1, N_FEAT), jnp.float32)
    key = jax.random.normal(kk, (B, T2, N_FEAT), jnp.float32)
    value = jax.random.normal(kv, (B, T2, N_FEAT), jnp.float32)

    # padding mask (B, 1, T2): batch 0 full length, batch 1 valid up to 12
    lengths = jnp.array([T2, 12], dtype=jnp.int32)
    mask = (jnp.arange(T2)[None, None, :] < lengths[:, None, None]).astype(jnp.float32)

    out, (k_cache, v_cache) = cross_attention(query, key, value, mask, params)
    out = jax.block_until_ready(out)

    # tolerance relaxed slightly vs. exact f32 because of the EUP approximate
    # reciprocal in the softmax normalizer (rel. err ~1e-4).
    ref_out = reference_forward(query, key, value, mask, params)
    np.testing.assert_allclose(np.asarray(out), np.asarray(ref_out),
                               rtol=1e-3, atol=1e-3)

    # cache (projected K/V) also comes from the kernel now — check it too.
    (wq, bq, wk, bk, wv, bv, wo, bo) = params
    k_ref = (key @ wk + bk).reshape(B, T2, N_HEAD, D_K).transpose(0, 2, 1, 3)
    v_ref = (value @ wv + bv).reshape(B, T2, N_HEAD, D_K).transpose(0, 2, 1, 3)
    np.testing.assert_allclose(np.asarray(k_cache), np.asarray(k_ref),
                               rtol=1e-4, atol=1e-4)
    np.testing.assert_allclose(np.asarray(v_cache), np.asarray(v_ref),
                               rtol=1e-4, atol=1e-4)

    print("KERNEL_OK")
</pallas_src>

<mosaic_0001>
module attributes {stable_mosaic.version = 11 : i64} {
  func.func @cross_attn_kernel(%arg0: i32, %arg1: memref<2xi32, #tpu.memory_space<smem>>, %arg2: memref<1x8x32xf32, #tpu.memory_space<vmem>>, %arg3: memref<1x16x32xf32, #tpu.memory_space<vmem>>, %arg4: memref<1x16x32xf32, #tpu.memory_space<vmem>>, %arg5: memref<32x96xf32, #tpu.memory_space<vmem>>, %arg6: memref<1x96xf32, #tpu.memory_space<vmem>>, %arg7: memref<32x32xf32, #tpu.memory_space<vmem>>, %arg8: memref<1x32xf32, #tpu.memory_space<vmem>>, %arg9: memref<1x8x32xf32, #tpu.memory_space<vmem>>, %arg10: memref<1x16x32xf32, #tpu.memory_space<vmem>>, %arg11: memref<1x16x32xf32, #tpu.memory_space<vmem>>, %arg12: memref<40x32xf32, #tpu.memory_space<vmem>>) attributes {dimension_semantics = [#tpu.dimension_semantics<parallel>], iteration_bounds = array<i64: 2>, scalar_prefetch = 1 : i64, scratch_operands = 1 : i64, tpu.core_type = #tpu.core_type<tc>, window_params = [{transform_indices = @transform_0, window_bounds = array<i64: 1, 8, 32>}, {transform_indices = @transform_1, window_bounds = array<i64: 1, 16, 32>}, {transform_indices = @transform_2, window_bounds = array<i64: 1, 16, 32>}, {pipeline_mode = #tpu.pipeline_mode<synchronous>, transform_indices = @transform_3, window_bounds = array<i64: 32, 96>}, {pipeline_mode = #tpu.pipeline_mode<synchronous>, transform_indices = @transform_4, window_bounds = array<i64: 1, 96>}, {pipeline_mode = #tpu.pipeline_mode<synchronous>, transform_indices = @transform_5, window_bounds = array<i64: 32, 32>}, {pipeline_mode = #tpu.pipeline_mode<synchronous>, transform_indices = @transform_6, window_bounds = array<i64: 1, 32>}, {transform_indices = @transform_7, window_bounds = array<i64: 1, 8, 32>}, {transform_indices = @transform_8, window_bounds = array<i64: 1, 16, 32>}, {transform_indices = @transform_9, window_bounds = array<i64: 1, 16, 32>}]} {
    %c0 = arith.constant 0 : index
    %c0_0 = arith.constant 0 : index
    %c0_1 = arith.constant 0 : index
    %0 = vector.load %arg2[%c0, %c0_0, %c0_1] : memref<1x8x32xf32, #tpu.memory_space<vmem>>, vector<1x8x32xf32>
    %1 = vector.shape_cast %0 : vector<1x8x32xf32> to vector<8x32xf32>
    %c0_2 = arith.constant 0 : index
    %c0_3 = arith.constant 0 : index
    %2 = vector.load %arg12[%c0_2, %c0_3] : memref<40x32xf32, #tpu.memory_space<vmem>>, vector<8x32xf32>
    tpu.vector_store %arg12[%c0_2, %c0_3], %1 {strides = array<i32>} : memref<40x32xf32, #tpu.memory_space<vmem>>, vector<8x32xf32>,
    %c0_4 = arith.constant 0 : index
    %c0_5 = arith.constant 0 : index
    %c0_6 = arith.constant 0 : index
    %3 = vector.load %arg3[%c0_4, %c0_5, %c0_6] : memref<1x16x32xf32, #tpu.memory_space<vmem>>, vector<1x16x32xf32>
    %4 = vector.shape_cast %3 : vector<1x16x32xf32> to vector<16x32xf32>
    %c8 = arith.constant 8 : index
    %c0_7 = arith.constant 0 : index
    %5 = vector.load %arg12[%c8, %c0_7] : memref<40x32xf32, #tpu.memory_space<vmem>>, vector<16x32xf32>
    tpu.vector_store %arg12[%c8, %c0_7], %4 {strides = array<i32>} : memref<40x32xf32, #tpu.memory_space<vmem>>, vector<16x32xf32>,
    %c0_8 = arith.constant 0 : index
    %c0_9 = arith.constant 0 : index
    %c0_10 = arith.constant 0 : index
    %6 = vector.load %arg4[%c0_8, %c0_9, %c0_10] : memref<1x16x32xf32, #tpu.memory_space<vmem>>, vector<1x16x32xf32>
    %7 = vector.shape_cast %6 : vector<1x16x32xf32> to vector<16x32xf32>
    %c24 = arith.constant 24 : index
    %c0_11 = arith.constant 0 : index
    %8 = vector.load %arg12[%c24, %c0_11] : memref<40x32xf32, #tpu.memory_space<vmem>>, vector<16x32xf32>
    tpu.vector_store %arg12[%c24, %c0_11], %7 {strides = array<i32>} : memref<40x32xf32, #tpu.memory_space<vmem>>, vector<16x32xf32>,
    %c0_12 = arith.constant 0 : index
    %c0_13 = arith.constant 0 : index
    %9 = vector.load %arg12[%c0_12, %c0_13] : memref<40x32xf32, #tpu.memory_space<vmem>>, vector<40x32xf32>
    %c0_14 = arith.constant 0 : index
    %c0_15 = arith.constant 0 : index
    %10 = vector.load %arg5[%c0_14, %c0_15] : memref<32x96xf32, #tpu.memory_space<vmem>>, vector<32x96xf32>
    %cst = arith.constant dense<0.000000e+00> : vector<40x96xf32>
    %11 = tpu.matmul %9, %10, %cst {dimension_numbers = #tpu.dot_dimension_numbers<[1], [0], [0], [1], [0, 0, 1, 1], [], []>} : vector<40x32xf32>, vector<32x96xf32>, vector<40x96xf32> -> vector<40x96xf32>
    %c0_16 = arith.constant 0 : index
    %c0_17 = arith.constant 0 : index
    %12 = vector.load %arg6[%c0_16, %c0_17] : memref<1x96xf32, #tpu.memory_space<vmem>>, vector<1x96xf32>
    %13 = vector.shape_cast %12 : vector<1x96xf32> to vector<96xf32>
    %14 = vector.shape_cast %13 : vector<96xf32> to vector<1x96xf32>
    %15 = vector.broadcast %14 : vector<1x96xf32> to vector<40x96xf32>
    %16 = arith.addf %11, %15 : vector<40x96xf32>
    %17 = vector.extract_strided_slice %16 {offsets = [0, 0], sizes = [8, 32], strides = [1, 1]} : vector<40x96xf32> to vector<8x32xf32>
    %18 = vector.extract_strided_slice %16 {offsets = [8, 32], sizes = [16, 32], strides = [1, 1]} : vector<40x96xf32> to vector<16x32xf32>
    %19 = vector.extract_strided_slice %16 {offsets = [24, 64], sizes = [16, 32], strides = [1, 1]} : vector<40x96xf32> to vector<16x32xf32>
    %c0_18 = arith.constant 0 : index
    %c0_19 = arith.constant 0 : index
    %c0_20 = arith.constant 0 : index
    %20 = vector.load %arg10[%c0_18, %c0_19, %c0_20] : memref<1x16x32xf32, #tpu.memory_space<vmem>>, vector<1x16x32xf32>
    %21 = vector.shape_cast %20 : vector<1x16x32xf32> to vector<16x32xf32>
    %22 = vector.shape_cast %18 : vector<16x32xf32> to vector<1x16x32xf32>
    tpu.vector_store %arg10[%c0_18, %c0_19, %c0_20], %22 {strides = array<i32>} : memref<1x16x32xf32, #tpu.memory_space<vmem>>, vector<1x16x32xf32>,
    %c0_21 = arith.constant 0 : index
    %c0_22 = arith.constant 0 : index
    %c0_23 = arith.constant 0 : index
    %23 = vector.load %arg11[%c0_21, %c0_22, %c0_23] : memref<1x16x32xf32, #tpu.memory_space<vmem>>, vector<1x16x32xf32>
    %24 = vector.shape_cast %23 : vector<1x16x32xf32> to vector<16x32xf32>
    %25 = vector.shape_cast %19 : vector<16x32xf32> to vector<1x16x32xf32>
    tpu.vector_store %arg11[%c0_21, %c0_22, %c0_23], %25 {strides = array<i32>} : memref<1x16x32xf32, #tpu.memory_space<vmem>>, vector<1x16x32xf32>,
    %26 = arith.index_cast %arg0 : i32 to index
    %27 = memref.load %arg1[%26] : memref<2xi32, #tpu.memory_space<smem>>
    %28 = tpu.iota {dimensions = array<i32: 1>} : vector<8x16xi32>
    %29 = vector.broadcast %27 : i32 to vector<8x16xi32>
    %30 = arith.cmpi slt, %28, %29 : vector<8x16xi32>
    %cst_24 = arith.constant 0.000000e+00 : f32
    %cst_25 = arith.constant -1.000000e+30 : f32
    %31 = vector.broadcast %cst_24 : f32 to vector<8x16xf32>
    %32 = vector.broadcast %cst_25 : f32 to vector<8x16xf32>
    %33 = arith.select %30, %31, %32 : vector<8x16xi1>, vector<8x16xf32>
    %cst_26 = arith.constant 0.353553385 : f32
    %34 = vector.broadcast %cst_26 : f32 to vector<8x32xf32>
    %35 = arith.mulf %17, %34 : vector<8x32xf32>
    %cst_27 = arith.constant 0.000000e+00 : f32
    %36 = vector.broadcast %cst_27 : f32 to vector<8x32xf32>
    %37 = vector.extract_strided_slice %35 {offsets = [0, 0], sizes = [8, 8], strides = [1, 1]} : vector<8x32xf32> to vector<8x8xf32>
    %38 = vector.extract_strided_slice %18 {offsets = [0, 0], sizes = [16, 8], strides = [1, 1]} : vector<16x32xf32> to vector<16x8xf32>
    %39 = vector.extract_strided_slice %19 {offsets = [0, 0], sizes = [16, 8], strides = [1, 1]} : vector<16x32xf32> to vector<16x8xf32>
    %cst_28 = arith.constant dense<0.000000e+00> : vector<8x16xf32>
    %40 = tpu.matmul %37, %38, %cst_28 {dimension_numbers = #tpu.dot_dimension_numbers<[1], [1], [0], [0], [0, 0, 1, 0], [], []>} : vector<8x8xf32>, vector<16x8xf32>, vector<8x16xf32> -> vector<8x16xf32>
    %41 = arith.addf %40, %33 : vector<8x16xf32>
    %cst_29 = arith.constant dense<0xFF800000> : vector<8xf32>
    %42 = vector.multi_reduction <maximumf>, %41, %cst_29 [1] : vector<8x16xf32> to vector<8xf32>
    %43 = vector.shape_cast %42 : vector<8xf32> to vector<8x1xf32>
    %44 = vector.broadcast %43 : vector<8x1xf32> to vector<8x16xf32>
    %45 = arith.subf %41, %44 : vector<8x16xf32>
    %46 = math.exp %45 : vector<8x16xf32>
    %cst_30 = arith.constant dense<0.000000e+00> : vector<8xf32>
    %47 = vector.multi_reduction <add>, %46, %cst_30 [1] : vector<8x16xf32> to vector<8xf32>
    %48 = vector.shape_cast %47 : vector<8xf32> to vector<8x1xf32>
    %49 = tpu.reciprocal %48 {approx = true} : vector<8x1xf32> -> vector<8x1xf32>
    %50 = vector.broadcast %49 : vector<8x1xf32> to vector<8x16xf32>
    %51 = arith.mulf %46, %50 : vector<8x16xf32>
    %cst_31 = arith.constant dense<0.000000e+00> : vector<8x8xf32>
    %52 = tpu.matmul %51, %39, %cst_31 {dimension_numbers = #tpu.dot_dimension_numbers<[1], [0], [0], [1], [0, 0, 1, 1], [], []>} : vector<8x16xf32>, vector<16x8xf32>, vector<8x8xf32> -> vector<8x8xf32>
    %c0_32 = arith.constant 0 : index
    %c0_33 = arith.constant 0 : index
    %53 = vector.load %arg7[%c0_32, %c0_33] : memref<32x32xf32, #tpu.memory_space<vmem>>, vector<8x32xf32>
    %cst_34 = arith.constant dense<0.000000e+00> : vector<8x32xf32>
    %54 = tpu.matmul %52, %53, %cst_34 {dimension_numbers = #tpu.dot_dimension_numbers<[1], [0], [0], [1], [0, 0, 1, 1], [], []>} : vector<8x8xf32>, vector<8x32xf32>, vector<8x32xf32> -> vector<8x32xf32>
    %55 = arith.addf %36, %54 : vector<8x32xf32>
    %56 = vector.extract_strided_slice %35 {offsets = [0, 8], sizes = [8, 8], strides = [1, 1]} : vector<8x32xf32> to vector<8x8xf32>
    %57 = vector.extract_strided_slice %18 {offsets = [0, 8], sizes = [16, 8], strides = [1, 1]} : vector<16x32xf32> to vector<16x8xf32>
    %58 = vector.extract_strided_slice %19 {offsets = [0, 8], sizes = [16, 8], strides = [1, 1]} : vector<16x32xf32> to vector<16x8xf32>
    %cst_35 = arith.constant dense<0.000000e+00> : vector<8x16xf32>
    %59 = tpu.matmul %56, %57, %cst_35 {dimension_numbers = #tpu.dot_dimension_numbers<[1], [1], [0], [0], [0, 0, 1, 0], [], []>} : vector<8x8xf32>, vector<16x8xf32>, vector<8x16xf32> -> vector<8x16xf32>
    %60 = arith.addf %59, %33 : vector<8x16xf32>
    %cst_36 = arith.constant dense<0xFF800000> : vector<8xf32>
    %61 = vector.multi_reduction <maximumf>, %60, %cst_36 [1] : vector<8x16xf32> to vector<8xf32>
    %62 = vector.shape_cast %61 : vector<8xf32> to vector<8x1xf32>
    %63 = vector.broadcast %62 : vector<8x1xf32> to vector<8x16xf32>
    %64 = arith.subf %60, %63 : vector<8x16xf32>
    %65 = math.exp %64 : vector<8x16xf32>
    %cst_37 = arith.constant dense<0.000000e+00> : vector<8xf32>
    %66 = vector.multi_reduction <add>, %65, %cst_37 [1] : vector<8x16xf32> to vector<8xf32>
    %67 = vector.shape_cast %66 : vector<8xf32> to vector<8x1xf32>
    %68 = tpu.reciprocal %67 {approx = true} : vector<8x1xf32> -> vector<8x1xf32>
    %69 = vector.broadcast %68 : vector<8x1xf32> to vector<8x16xf32>
    %70 = arith.mulf %65, %69 : vector<8x16xf32>
    %cst_38 = arith.constant dense<0.000000e+00> : vector<8x8xf32>
    %71 = tpu.matmul %70, %58, %cst_38 {dimension_numbers = #tpu.dot_dimension_numbers<[1], [0], [0], [1], [0, 0, 1, 1], [], []>} : vector<8x16xf32>, vector<16x8xf32>, vector<8x8xf32> -> vector<8x8xf32>
    %c8_39 = arith.constant 8 : index
    %c0_40 = arith.constant 0 : index
    %72 = vector.load %arg7[%c8_39, %c0_40] : memref<32x32xf32, #tpu.memory_space<vmem>>, vector<8x32xf32>
    %cst_41 = arith.constant dense<0.000000e+00> : vector<8x32xf32>
    %73 = tpu.matmul %71, %72, %cst_41 {dimension_numbers = #tpu.dot_dimension_numbers<[1], [0], [0], [1], [0, 0, 1, 1], [], []>} : vector<8x8xf32>, vector<8x32xf32>, vector<8x32xf32> -> vector<8x32xf32>
    %74 = arith.addf %55, %73 : vector<8x32xf32>
    %75 = vector.extract_strided_slice %35 {offsets = [0, 16], sizes = [8, 8], strides = [1, 1]} : vector<8x32xf32> to vector<8x8xf32>
    %76 = vector.extract_strided_slice %18 {offsets = [0, 16], sizes = [16, 8], strides = [1, 1]} : vector<16x32xf32> to vector<16x8xf32>
    %77 = vector.extract_strided_slice %19 {offsets = [0, 16], sizes = [16, 8], strides = [1, 1]} : vector<16x32xf32> to vector<16x8xf32>
    %cst_42 = arith.constant dense<0.000000e+00> : vector<8x16xf32>
    %78 = tpu.matmul %75, %76, %cst_42 {dimension_numbers = #tpu.dot_dimension_numbers<[1], [1], [0], [0], [0, 0, 1, 0], [], []>} : vector<8x8xf32>, vector<16x8xf32>, vector<8x16xf32> -> vector<8x16xf32>
    %79 = arith.addf %78, %33 : vector<8x16xf32>
    %cst_43 = arith.constant dense<0xFF800000> : vector<8xf32>
    %80 = vector.multi_reduction <maximumf>, %79, %cst_43 [1] : vector<8x16xf32> to vector<8xf32>
    %81 = vector.shape_cast %80 : vector<8xf32> to vector<8x1xf32>
    %82 = vector.broadcast %81 : vector<8x1xf32> to vector<8x16xf32>
    %83 = arith.subf %79, %82 : vector<8x16xf32>
    %84 = math.exp %83 : vector<8x16xf32>
    %cst_44 = arith.constant dense<0.000000e+00> : vector<8xf32>
    %85 = vector.multi_reduction <add>, %84, %cst_44 [1] : vector<8x16xf32> to vector<8xf32>
    %86 = vector.shape_cast %85 : vector<8xf32> to vector<8x1xf32>
    %87 = tpu.reciprocal %86 {approx = true} : vector<8x1xf32> -> vector<8x1xf32>
    %88 = vector.broadcast %87 : vector<8x1xf32> to vector<8x16xf32>
    %89 = arith.mulf %84, %88 : vector<8x16xf32>
    %cst_45 = arith.constant dense<0.000000e+00> : vector<8x8xf32>
    %90 = tpu.matmul %89, %77, %cst_45 {dimension_numbers = #tpu.dot_dimension_numbers<[1], [0], [0], [1], [0, 0, 1, 1], [], []>} : vector<8x16xf32>, vector<16x8xf32>, vector<8x8xf32> -> vector<8x8xf32>
    %c16 = arith.constant 16 : index
    %c0_46 = arith.constant 0 : index
    %91 = vector.load %arg7[%c16, %c0_46] : memref<32x32xf32, #tpu.memory_space<vmem>>, vector<8x32xf32>
    %cst_47 = arith.constant dense<0.000000e+00> : vector<8x32xf32>
    %92 = tpu.matmul %90, %91, %cst_47 {dimension_numbers = #tpu.dot_dimension_numbers<[1], [0], [0], [1], [0, 0, 1, 1], [], []>} : vector<8x8xf32>, vector<8x32xf32>, vector<8x32xf32> -> vector<8x32xf32>
    %93 = arith.addf %74, %92 : vector<8x32xf32>
    %94 = vector.extract_strided_slice %35 {offsets = [0, 24], sizes = [8, 8], strides = [1, 1]} : vector<8x32xf32> to vector<8x8xf32>
    %95 = vector.extract_strided_slice %18 {offsets = [0, 24], sizes = [16, 8], strides = [1, 1]} : vector<16x32xf32> to vector<16x8xf32>
    %96 = vector.extract_strided_slice %19 {offsets = [0, 24], sizes = [16, 8], strides = [1, 1]} : vector<16x32xf32> to vector<16x8xf32>
    %cst_48 = arith.constant dense<0.000000e+00> : vector<8x16xf32>
    %97 = tpu.matmul %94, %95, %cst_48 {dimension_numbers = #tpu.dot_dimension_numbers<[1], [1], [0], [0], [0, 0, 1, 0], [], []>} : vector<8x8xf32>, vector<16x8xf32>, vector<8x16xf32> -> vector<8x16xf32>
    %98 = arith.addf %97, %33 : vector<8x16xf32>
    %cst_49 = arith.constant dense<0xFF800000> : vector<8xf32>
    %99 = vector.multi_reduction <maximumf>, %98, %cst_49 [1] : vector<8x16xf32> to vector<8xf32>
    %100 = vector.shape_cast %99 : vector<8xf32> to vector<8x1xf32>
    %101 = vector.broadcast %100 : vector<8x1xf32> to vector<8x16xf32>
    %102 = arith.subf %98, %101 : vector<8x16xf32>
    %103 = math.exp %102 : vector<8x16xf32>
    %cst_50 = arith.constant dense<0.000000e+00> : vector<8xf32>
    %104 = vector.multi_reduction <add>, %103, %cst_50 [1] : vector<8x16xf32> to vector<8xf32>
    %105 = vector.shape_cast %104 : vector<8xf32> to vector<8x1xf32>
    %106 = tpu.reciprocal %105 {approx = true} : vector<8x1xf32> -> vector<8x1xf32>
    %107 = vector.broadcast %106 : vector<8x1xf32> to vector<8x16xf32>
    %108 = arith.mulf %103, %107 : vector<8x16xf32>
    %cst_51 = arith.constant dense<0.000000e+00> : vector<8x8xf32>
    %109 = tpu.matmul %108, %96, %cst_51 {dimension_numbers = #tpu.dot_dimension_numbers<[1], [0], [0], [1], [0, 0, 1, 1], [], []>} : vector<8x16xf32>, vector<16x8xf32>, vector<8x8xf32> -> vector<8x8xf32>
    %c24_52 = arith.constant 24 : index
    %c0_53 = arith.constant 0 : index
    %110 = vector.load %arg7[%c24_52, %c0_53] : memref<32x32xf32, #tpu.memory_space<vmem>>, vector<8x32xf32>
    %cst_54 = arith.constant dense<0.000000e+00> : vector<8x32xf32>
    %111 = tpu.matmul %109, %110, %cst_54 {dimension_numbers = #tpu.dot_dimension_numbers<[1], [0], [0], [1], [0, 0, 1, 1], [], []>} : vector<8x8xf32>, vector<8x32xf32>, vector<8x32xf32> -> vector<8x32xf32>
    %112 = arith.addf %93, %111 : vector<8x32xf32>
    %c0_55 = arith.constant 0 : index
    %c0_56 = arith.constant 0 : index
    %113 = vector.load %arg8[%c0_55, %c0_56] : memref<1x32xf32, #tpu.memory_space<vmem>>, vector<1x32xf32>
    %114 = vector.shape_cast %113 : vector<1x32xf32> to vector<32xf32>
    %115 = vector.shape_cast %114 : vector<32xf32> to vector<1x32xf32>
    %116 = vector.broadcast %115 : vector<1x32xf32> to vector<8x32xf32>
    %117 = arith.addf %112, %116 : vector<8x32xf32>
    %c0_57 = arith.constant 0 : index
    %c0_58 = arith.constant 0 : index
    %c0_59 = arith.constant 0 : index
    %118 = vector.load %arg9[%c0_57, %c0_58, %c0_59] : memref<1x8x32xf32, #tpu.memory_space<vmem>>, vector<1x8x32xf32>
    %119 = vector.shape_cast %118 : vector<1x8x32xf32> to vector<8x32xf32>
    %120 = vector.shape_cast %117 : vector<8x32xf32> to vector<1x8x32xf32>
    tpu.vector_store %arg9[%c0_57, %c0_58, %c0_59], %120 {strides = array<i32>} : memref<1x8x32xf32, #tpu.memory_space<vmem>>, vector<1x8x32xf32>,
    return
  }
  func.func @transform_0(%arg0: i32, %arg1: memref<2xi32, #tpu.memory_space<smem>>) -> (i32, i32, i32) {
    %c0_i32 = arith.constant 0 : i32
    %c0_i32_0 = arith.constant 0 : i32
    %c0_i32_1 = arith.constant 0 : i32
    return %arg0, %c0_i32, %c0_i32_0 : i32, i32, i32
  }
  func.func @transform_1(%arg0: i32, %arg1: memref<2xi32, #tpu.memory_space<smem>>) -> (i32, i32, i32) {
    %c0_i32 = arith.constant 0 : i32
    %c0_i32_0 = arith.constant 0 : i32
    %c0_i32_1 = arith.constant 0 : i32
    return %arg0, %c0_i32, %c0_i32_0 : i32, i32, i32
  }
  func.func @transform_2(%arg0: i32, %arg1: memref<2xi32, #tpu.memory_space<smem>>) -> (i32, i32, i32) {
    %c0_i32 = arith.constant 0 : i32
    %c0_i32_0 = arith.constant 0 : i32
    %c0_i32_1 = arith.constant 0 : i32
    return %arg0, %c0_i32, %c0_i32_0 : i32, i32, i32
  }
  func.func @transform_3(%arg0: i32, %arg1: memref<2xi32, #tpu.memory_space<smem>>) -> (i32, i32) {
    %c0_i32 = arith.constant 0 : i32
    %c0_i32_0 = arith.constant 0 : i32
    %c0_i32_1 = arith.constant 0 : i32
    return %c0_i32, %c0_i32_0 : i32, i32
  }
  func.func @transform_4(%arg0: i32, %arg1: memref<2xi32, #tpu.memory_space<smem>>) -> (i32, i32) {
    %c0_i32 = arith.constant 0 : i32
    %c0_i32_0 = arith.constant 0 : i32
    %c0_i32_1 = arith.constant 0 : i32
    return %c0_i32, %c0_i32_0 : i32, i32
  }
  func.func @transform_5(%arg0: i32, %arg1: memref<2xi32, #tpu.memory_space<smem>>) -> (i32, i32) {
    %c0_i32 = arith.constant 0 : i32
    %c0_i32_0 = arith.constant 0 : i32
    %c0_i32_1 = arith.constant 0 : i32
    return %c0_i32, %c0_i32_0 : i32, i32
  }
  func.func @transform_6(%arg0: i32, %arg1: memref<2xi32, #tpu.memory_space<smem>>) -> (i32, i32) {
    %c0_i32 = arith.constant 0 : i32
    %c0_i32_0 = arith.constant 0 : i32
    %c0_i32_1 = arith.constant 0 : i32
    return %c0_i32, %c0_i32_0 : i32, i32
  }
  func.func @transform_7(%arg0: i32, %arg1: memref<2xi32, #tpu.memory_space<smem>>) -> (i32, i32, i32) {
    %c0_i32 = arith.constant 0 : i32
    %c0_i32_0 = arith.constant 0 : i32
    %c0_i32_1 = arith.constant 0 : i32
    return %arg0, %c0_i32, %c0_i32_0 : i32, i32, i32
  }
  func.func @transform_8(%arg0: i32, %arg1: memref<2xi32, #tpu.memory_space<smem>>) -> (i32, i32, i32) {
    %c0_i32 = arith.constant 0 : i32
    %c0_i32_0 = arith.constant 0 : i32
    %c0_i32_1 = arith.constant 0 : i32
    return %arg0, %c0_i32, %c0_i32_0 : i32, i32, i32
  }
  func.func @transform_9(%arg0: i32, %arg1: memref<2xi32, #tpu.memory_space<smem>>) -> (i32, i32, i32) {
    %c0_i32 = arith.constant 0 : i32
    %c0_i32_0 = arith.constant 0 : i32
    %c0_i32_1 = arith.constant 0 : i32
    return %arg0, %c0_i32, %c0_i32_0 : i32, i32, i32
  }
}

</mosaic_0001>

<llo_original>
// kernel: tpu_custom_call.1
$region0: #{tpu_custom_call.1}
  #allocation0 [shape = 'u32[]', space=smem, size = 0x4, offset = 0x4, fixed_abs, tag = 'smem constant byte address 0x4 - core index']
  #allocation1 [shape = 'u32[144,128]{1,0:T(1,128)}', space=vmem, size = 0x12000, scoped, tag = 'internal scratch']
  #allocation2 [shape = 'f32[40,32]{1,0:T(8,128)}', space=vmem, size = 0x5000, scoped, tag = 'scratch operand']
  #allocation3 [shape = 's32[1]{0}', space=sflag, size = 0x4, scoped, tag = 'scoped memory for tpu_custom_call.1']
  #allocation4 [shape = 'u8[512]{0}', space=smem, size = 0x200, scoped, tag = 'prefetched SMEM operand 0']
  %s0 = inlined_call_operand.hbm [shape: s32[2], index: 0, kind: input, shape index: {}]
  %s1 = inlined_call_operand.hbm [shape: f32[2,8,32], index: 1, kind: input, shape index: {}]
  %s2 = inlined_call_operand.hbm [shape: f32[2,16,32], index: 2, kind: input, shape index: {}]
  %s3 = inlined_call_operand.hbm [shape: f32[2,16,32], index: 3, kind: input, shape index: {}]
  %s4 = inlined_call_operand.hbm [shape: f32[32,96], index: 4, kind: input, shape index: {}]
  %s5 = inlined_call_operand.vmem [shape: f32[1,96], index: 5, kind: input, shape index: {}]
  %s6 = inlined_call_operand.hbm [shape: f32[32,32], index: 6, kind: input, shape index: {}]
  %s7 = inlined_call_operand.vmem [shape: f32[1,32], index: 7, kind: input, shape index: {}]
  %s8 = inlined_call_operand.hbm [shape: f32[2,8,32], index: 8, kind: output, shape index: {0}]
  %s9 = inlined_call_operand.hbm [shape: f32[2,16,32], index: 9, kind: output, shape index: {1}]
  %s10 = inlined_call_operand.hbm [shape: f32[2,16,32], index: 10, kind: output, shape index: {2}]
  %11 = xla_tuple %s8, %s9, %s10
  %s12 = sld [smem:[#allocation0]]
  $region97: #{tpu_custom_call.1} parent=0
    _
  %s14 = ssub.s32 1, %s12
  %s15 = scalar_select 0, %s14, %s12
  %17 = dma.hbm_to_smem %s0, 16, [#allocation4], [#allocation3]
  %18 = dma.done [#allocation3], 16
  %19 = sfence
  $region1: #{tpu_custom_call.1} parent=0
    #allocation5 [shape = 'u8[8192]{0}', space=vmem, size = 0x2000, scoped, tag = 'input window, operand 1']
    #allocation6 [shape = 's32[2]{0}', space=sflag, size = 0x8, scoped, tag = 'scoped memory for tpu_custom_call.1']
    #allocation7 [shape = 's32[2]{0}', space=sflag, size = 0x8, scoped, tag = 'scoped memory for tpu_custom_call.1']
    #allocation8 [shape = 'u8[16384]{0}', space=vmem, size = 0x4000, scoped, tag = 'input window, operand 2']
    #allocation9 [shape = 's32[2]{0}', space=sflag, size = 0x8, scoped, tag = 'scoped memory for tpu_custom_call.1']
    #allocation10 [shape = 'u8[16384]{0}', space=vmem, size = 0x4000, scoped, tag = 'input window, operand 3']
    #allocation11 [shape = 'u8[16384]{0}', space=vmem, size = 0x4000, scoped, tag = 'input window, operand 4, single buffered']
    #allocation12 [shape = 's32[1]{0}', space=sflag, size = 0x4, scoped, tag = 'scoped memory for tpu_custom_call.1']
    #allocation13 [shape = 'u8[16384]{0}', space=vmem, size = 0x4000, scoped, tag = 'input window, operand 6, single buffered']
    #allocation14 [shape = 'u8[8192]{0}', space=vmem, size = 0x2000, scoped, tag = 'output window, operand 0']
    #allocation15 [shape = 'u8[16384]{0}', space=vmem, size = 0x4000, scoped, tag = 'output window, operand 1']
    #allocation16 [shape = 's32[2]{0}', space=sflag, size = 0x8, scoped, tag = 'scoped memory for tpu_custom_call.1']
    #allocation17 [shape = 'u8[16384]{0}', space=vmem, size = 0x4000, scoped, tag = 'output window, operand 2']
    %20 = vsyncpa [#allocation6], 0
    %s21 = scalar_lea.sflag [#allocation6], 1
    %22 = vsyncpa %s21, 0
    %23 = vsyncpa [#allocation9], 0
    %s24 = scalar_lea.sflag [#allocation9], 1
    %25 = vsyncpa %s24, 0
    %26 = vsyncpa [#allocation12], 0
    %27 = vsyncpa [#allocation7], 0
    %s28 = scalar_lea.sflag [#allocation7], 1
    %29 = vsyncpa %s28, 0
    %30 = vsyncpa [#allocation16], 0
    %s31 = scalar_lea.sflag [#allocation16], 1
    %32 = vsyncpa %s31, 0
    loop: start=0, step=1, limit=4
    $region2: #{tpu_custom_call.1} parent=1 // loop_pre_header
      _
    $region3: #{tpu_custom_call.1} parent=1 // loop_header
      %s34 = sphi 0, %s38
      %p35 = scmp.ge.s32.totalorder %s34, 4
      %s44 = sphi 0, %s46
      %s47 = sphi 0, %s44
      %s48 = sphi 0, %s47
      %s64 = sphi 0, %s48
      %s70 = sphi 0, %s72
      %s73 = sphi 0, %s70
      %s74 = sphi 0, %s73
      %s90 = sphi 0, %s74
      %s96 = sphi 0, %s98
      %s99 = sphi 0, %s96
      %s100 = sphi 0, %s99
      %s116 = sphi 0, %s100
      %s120 = sphi 0, %s120
      %s122 = sphi 0, %s120
      %s123 = sphi 0, %s122
      %s137 = sphi 0, %s123
      %s141 = sphi 0, %s141
      %s143 = sphi 0, %s141
      %s144 = sphi 0, %s143
      %s158 = sphi 0, %s144
      %s162 = sphi 0, %s162
      %s164 = sphi 0, %s162
      %s165 = sphi 0, %s164
      %s179 = sphi 0, %s165
      %s183 = sphi 0, %s183
      %s185 = sphi 0, %s183
      %s186 = sphi 0, %s185
      %s200 = sphi 0, %s186
      %s206 = sphi 0, %s208
      %s209 = sphi 0, %s206
      %s210 = sphi 0, %s209
      %s226 = sphi 0, %s210
      %s232 = sphi 0, %s234
      %s235 = sphi 0, %s232
      %s236 = sphi 0, %s235
      %s252 = sphi 0, %s236
      %s258 = sphi 0, %s260
      %s261 = sphi 0, %s258
      %s262 = sphi 0, %s261
      %s278 = sphi 0, %s262
    $region4: #{tpu_custom_call.1} parent=1 // loop_header_branch
      %37 = sbr.rel (%p35) target = $region8
    $region5: #{tpu_custom_call.1} parent=1 // loop_body
      %s39 = ssub.s32 %s34, 1
      %s40 = ssub.s32 %s34, 2
      %s41 = sadd.s32 %s34, 1
      %s42 = ssub.s32 %s34, %s41
      %p43 = scmp.eq.s32.totalorder %s42, 0
      %s45 = sadd.s32 %s44, 1
      %s46 = scalar_select %p43, %s44, %s45
      %p49 = pneg %p43
      %p50 = scmp.eq.s32.totalorder %s34, 1
      %p51 = por %p49, %p50
      %p52 = scmp.ne.s32.totalorder %s44, %s47
      %p53 = scmp.eq.s32.totalorder %s34, 0
      %p54 = por %p52, %p53
      %p55 = scmp.ne.s32.totalorder %s44, %s47
      %p56 = scmp.eq.s32.totalorder %s39, 1
      %p57 = por %p55, %p56
      %p58 = scmp.ne.s32.totalorder %s47, %s48
      %p59 = scmp.eq.s32.totalorder %s39, 0
      %p60 = por %p58, %p59
      %p61 = scmp.ne.s32.totalorder %s47, %s48
      %p62 = scmp.eq.s32.totalorder %s40, 1
      %p63 = por %p61, %p62
      %p65 = scmp.ne.s32.totalorder %s48, %s64
      %p66 = scmp.eq.s32.totalorder %s40, 0
      %p67 = por %p65, %p66
      %s68 = ssub.s32 %s34, %s41
      %p69 = scmp.eq.s32.totalorder %s68, 0
      %s71 = sadd.s32 %s70, 1
      %s72 = scalar_select %p69, %s70, %s71
      %p75 = pneg %p69
      %p76 = scmp.eq.s32.totalorder %s34, 1
      %p77 = por %p75, %p76
      %p78 = scmp.ne.s32.totalorder %s70, %s73
      %p79 = scmp.eq.s32.totalorder %s34, 0
      %p80 = por %p78, %p79
      %p81 = scmp.ne.s32.totalorder %s70, %s73
      %p82 = scmp.eq.s32.totalorder %s39, 1
      %p83 = por %p81, %p82
      %p84 = scmp.ne.s32.totalorder %s73, %s74
      %p85 = scmp.eq.s32.totalorder %s39, 0
      %p86 = por %p84, %p85
      %p87 = scmp.ne.s32.totalorder %s73, %s74
      %p88 = scmp.eq.s32.totalorder %s40, 1
      %p89 = por %p87, %p88
      %p91 = scmp.ne.s32.totalorder %s74, %s90
      %p92 = scmp.eq.s32.totalorder %s40, 0
      %p93 = por %p91, %p92
      %s94 = ssub.s32 %s34, %s41
      %p95 = scmp.eq.s32.totalorder %s94, 0
      %s97 = sadd.s32 %s96, 1
      %s98 = scalar_select %p95, %s96, %s97
      %p101 = pneg %p95
      %p102 = scmp.eq.s32.totalorder %s34, 1
      %p103 = por %p101, %p102
      %p104 = scmp.ne.s32.totalorder %s96, %s99
      %p105 = scmp.eq.s32.totalorder %s34, 0
      %p106 = por %p104, %p105
      %p107 = scmp.ne.s32.totalorder %s96, %s99
      %p108 = scmp.eq.s32.totalorder %s39, 1
      %p109 = por %p107, %p108
      %p110 = scmp.ne.s32.totalorder %s99, %s100
      %p111 = scmp.eq.s32.totalorder %s39, 0
      %p112 = por %p110, %p111
      %p113 = scmp.ne.s32.totalorder %s99, %s100
      %p114 = scmp.eq.s32.totalorder %s40, 1
      %p115 = por %p113, %p114
      %p117 = scmp.ne.s32.totalorder %s100, %s116
      %p118 = scmp.eq.s32.totalorder %s40, 0
      %p119 = por %p117, %p118
      %s121 = sadd.s32 %s120, 1
      %p124 = scmp.eq.s32.totalorder %s34, 1
      %p125 = scmp.ne.s32.totalorder %s120, %s122
      %p126 = scmp.eq.s32.totalorder %s34, 0
      %p127 = por %p125, %p126
      %p128 = scmp.ne.s32.totalorder %s120, %s122
      %p129 = scmp.eq.s32.totalorder %s39, 1
      %p130 = por %p128, %p129
      %p131 = scmp.ne.s32.totalorder %s122, %s123
      %p132 = scmp.eq.s32.totalorder %s39, 0
      %p133 = por %p131, %p132
      %p134 = scmp.ne.s32.totalorder %s122, %s123
      %p135 = scmp.eq.s32.totalorder %s40, 1
      %p136 = por %p134, %p135
      %p138 = scmp.ne.s32.totalorder %s123, %s137
      %p139 = scmp.eq.s32.totalorder %s40, 0
      %p140 = por %p138, %p139
      %s142 = sadd.s32 %s141, 1
      %p145 = scmp.eq.s32.totalorder %s34, 1
      %p146 = scmp.ne.s32.totalorder %s141, %s143
      %p147 = scmp.eq.s32.totalorder %s34, 0
      %p148 = por %p146, %p147
      %p149 = scmp.ne.s32.totalorder %s141, %s143
      %p150 = scmp.eq.s32.totalorder %s39, 1
      %p151 = por %p149, %p150
      %p152 = scmp.ne.s32.totalorder %s143, %s144
      %p153 = scmp.eq.s32.totalorder %s39, 0
      %p154 = por %p152, %p153
      %p155 = scmp.ne.s32.totalorder %s143, %s144
      %p156 = scmp.eq.s32.totalorder %s40, 1
      %p157 = por %p155, %p156
      %p159 = scmp.ne.s32.totalorder %s144, %s158
      %p160 = scmp.eq.s32.totalorder %s40, 0
      %p161 = por %p159, %p160
      %s163 = sadd.s32 %s162, 1
      %p166 = scmp.eq.s32.totalorder %s34, 1
      %p167 = scmp.ne.s32.totalorder %s162, %s164
      %p168 = scmp.eq.s32.totalorder %s34, 0
      %p169 = por %p167, %p168
      %p170 = scmp.ne.s32.totalorder %s162, %s164
      %p171 = scmp.eq.s32.totalorder %s39, 1
      %p172 = por %p170, %p171
      %p173 = scmp.ne.s32.totalorder %s164, %s165
      %p174 = scmp.eq.s32.totalorder %s39, 0
      %p175 = por %p173, %p174
      %p176 = scmp.ne.s32.totalorder %s164, %s165
      %p177 = scmp.eq.s32.totalorder %s40, 1
      %p178 = por %p176, %p177
      %p180 = scmp.ne.s32.totalorder %s165, %s179
      %p181 = scmp.eq.s32.totalorder %s40, 0
      %p182 = por %p180, %p181
      %s184 = sadd.s32 %s183, 1
      %p187 = scmp.eq.s32.totalorder %s34, 1
      %p188 = scmp.ne.s32.totalorder %s183, %s185
      %p189 = scmp.eq.s32.totalorder %s34, 0
      %p190 = por %p188, %p189
      %p191 = scmp.ne.s32.totalorder %s183, %s185
      %p192 = scmp.eq.s32.totalorder %s39, 1
      %p193 = por %p191, %p192
      %p194 = scmp.ne.s32.totalorder %s185, %s186
      %p195 = scmp.eq.s32.totalorder %s39, 0
      %p196 = por %p194, %p195
      %p197 = scmp.ne.s32.totalorder %s185, %s186
      %p198 = scmp.eq.s32.totalorder %s40, 1
      %p199 = por %p197, %p198
      %p201 = scmp.ne.s32.totalorder %s186, %s200
      %p202 = scmp.eq.s32.totalorder %s40, 0
      %p203 = por %p201, %p202
      %s204 = ssub.s32 %s34, %s41
      %p205 = scmp.eq.s32.totalorder %s204, 0
      %s207 = sadd.s32 %s206, 1
      %s208 = scalar_select %p205, %s206, %s207
      %p211 = pneg %p205
      %p212 = scmp.eq.s32.totalorder %s34, 1
      %p213 = por %p211, %p212
      %p214 = scmp.ne.s32.totalorder %s206, %s209
      %p215 = scmp.eq.s32.totalorder %s34, 0
      %p216 = por %p214, %p215
      %p217 = scmp.ne.s32.totalorder %s206, %s209
      %p218 = scmp.eq.s32.totalorder %s39, 1
      %p219 = por %p217, %p218
      %p220 = scmp.ne.s32.totalorder %s209, %s210
      %p221 = scmp.eq.s32.totalorder %s39, 0
      %p222 = por %p220, %p221
      %p223 = scmp.ne.s32.totalorder %s209, %s210
      %p224 = scmp.eq.s32.totalorder %s40, 1
      %p225 = por %p223, %p224
      %p227 = scmp.ne.s32.totalorder %s210, %s226
      %p228 = scmp.eq.s32.totalorder %s40, 0
      %p229 = por %p227, %p228
      %s230 = ssub.s32 %s34, %s41
      %p231 = scmp.eq.s32.totalorder %s230, 0
      %s233 = sadd.s32 %s232, 1
      %s234 = scalar_select %p231, %s232, %s233
      %p237 = pneg %p231
      %p238 = scmp.eq.s32.totalorder %s34, 1
      %p239 = por %p237, %p238
      %p240 = scmp.ne.s32.totalorder %s232, %s235
      %p241 = scmp.eq.s32.totalorder %s34, 0
      %p242 = por %p240, %p241
      %p243 = scmp.ne.s32.totalorder %s232, %s235
      %p244 = scmp.eq.s32.totalorder %s39, 1
      %p245 = por %p243, %p244
      %p246 = scmp.ne.s32.totalorder %s235, %s236
      %p247 = scmp.eq.s32.totalorder %s39, 0
      %p248 = por %p246, %p247
      %p249 = scmp.ne.s32.totalorder %s235, %s236
      %p250 = scmp.eq.s32.totalorder %s40, 1
      %p251 = por %p249, %p250
      %p253 = scmp.ne.s32.totalorder %s236, %s252
      %p254 = scmp.eq.s32.totalorder %s40, 0
      %p255 = por %p253, %p254
      %s256 = ssub.s32 %s34, %s41
      %p257 = scmp.eq.s32.totalorder %s256, 0
      %s259 = sadd.s32 %s258, 1
      %s260 = scalar_select %p257, %s258, %s259
      %p263 = pneg %p257
      %p264 = scmp.eq.s32.totalorder %s34, 1
      %p265 = por %p263, %p264
      %p266 = scmp.ne.s32.totalorder %s258, %s261
      %p267 = scmp.eq.s32.totalorder %s34, 0
      %p268 = por %p266, %p267
      %p269 = scmp.ne.s32.totalorder %s258, %s261
      %p270 = scmp.eq.s32.totalorder %s39, 1
      %p271 = por %p269, %p270
      %p272 = scmp.ne.s32.totalorder %s261, %s262
      %p273 = scmp.eq.s32.totalorder %s39, 0
      %p274 = por %p272, %p273
      %p275 = scmp.ne.s32.totalorder %s261, %s262
      %p276 = scmp.eq.s32.totalorder %s40, 1
      %p277 = por %p275, %p276
      %p279 = scmp.ne.s32.totalorder %s262, %s278
      %p280 = scmp.eq.s32.totalorder %s40, 0
      %p281 = por %p279, %p280
      %p282 = scmp.le.s32.totalorder 1, %s34
      %p283 = scmp.lt.s32.totalorder %s34, 3
      %p284 = pnand %p282, %p283
      %p285 = pneg %p284
      // Predicated region
      $region9: #{tpu_custom_call.1} parent=5 // pred_check
        _
      $region10: #{tpu_custom_call.1} parent=5 // pred_check_branch
        %287 = sbr.rel (%p284) target = $region12
      $region11: #{tpu_custom_call.1} parent=5 // pred_region
        %s288 = ssub.s32 %s34, 1
        // Predicated region
        $region13: #{tpu_custom_call.1} parent=11 // pred_check
          %p289 = pneg %p133
        $region14: #{tpu_custom_call.1} parent=11 // pred_check_branch
          %291 = sbr.rel (%p289) target = $region16
        $region15: #{tpu_custom_call.1} parent=11 // pred_region
          %s293 = ssub.s32 512, 512
          %294 = vsyncadd [#allocation12], %s293
          %s295 = sshll.u32 [#allocation11], 4
          %s296 = int_to_ptr.vmem [resolvable:$true] %s295
          %301 = dma.hbm_to_vmem [thread:$0]  %s4, 512, %s296, [#allocation12], 128, 128, 8
        $region16: #{tpu_custom_call.1} parent=11 // pred_fallthru
          _
        // Predicated region
        $region17: #{tpu_custom_call.1} parent=11 // pred_check
          %p302 = pneg %p154
        $region18: #{tpu_custom_call.1} parent=11 // pred_check_branch
          %304 = sbr.rel (%p302) target = $region20
        $region19: #{tpu_custom_call.1} parent=11 // pred_region
          _
        $region20: #{tpu_custom_call.1} parent=11 // pred_fallthru
          _
        // Predicated region
        $region21: #{tpu_custom_call.1} parent=11 // pred_check
          %p305 = pneg %p175
        $region22: #{tpu_custom_call.1} parent=11 // pred_check_branch
          %307 = sbr.rel (%p305) target = $region24
        $region23: #{tpu_custom_call.1} parent=11 // pred_region
          %s309 = ssub.s32 512, 512
          %310 = vsyncadd [#allocation12], %s309
          %s311 = sshll.u32 [#allocation13], 4
          %s312 = int_to_ptr.vmem [resolvable:$true] %s311
          %317 = dma.hbm_to_vmem [thread:$0]  %s6, 512, %s312, [#allocation12], 128, 128, 8
        $region24: #{tpu_custom_call.1} parent=11 // pred_fallthru
          _
        // Predicated region
        $region25: #{tpu_custom_call.1} parent=11 // pred_check
          %p318 = pneg %p196
        $region26: #{tpu_custom_call.1} parent=11 // pred_check_branch
          %320 = sbr.rel (%p318) target = $region28
        $region27: #{tpu_custom_call.1} parent=11 // pred_region
          _
        $region28: #{tpu_custom_call.1} parent=11 // pred_fallthru
          _
      $region12: #{tpu_custom_call.1} parent=5 // pred_fallthru
        _
      %p321 = scmp.lt.s32.totalorder %s34, 2
      // Predicated region
      $region29: #{tpu_custom_call.1} parent=5 // pred_check
        %p322 = pneg %p321
      $region30: #{tpu_custom_call.1} parent=5 // pred_check_branch
        %324 = sbr.rel (%p322) target = $region32
      $region31: #{tpu_custom_call.1} parent=5 // pred_region
        // Predicated region
        $region33: #{tpu_custom_call.1} parent=31 // pred_check
          %p325 = pneg %p54
        $region34: #{tpu_custom_call.1} parent=31 // pred_check_branch
          %327 = sbr.rel (%p325) target = $region36
        $region35: #{tpu_custom_call.1} parent=31 // pred_region
          %s328 = sand.u32 %s44, 1
          %s329 = scalar_lea.sflag [#allocation6], %s328
          %s330 = sand.u32 %s44, 1
          %s331 = smul.addr %s330, 8
          %s332 = scalar_lea.vmem [#allocation5], %s331
          %s334 = ssub.s32 128, 128
          %335 = vsyncadd %s329, %s334
          %s336 = smul.addr %s34, 128
          %s337 = scalar_lea.hbm %s1, %s336
          %s339 = sshll.u32 %s332, 4
          %s340 = int_to_ptr.vmem [resolvable:$true] %s339
          %342 = dma.hbm_to_vmem [thread:$0]  %s337, 128, %s340, %s329
        $region36: #{tpu_custom_call.1} parent=31 // pred_fallthru
          _
        // Predicated region
        $region37: #{tpu_custom_call.1} parent=31 // pred_check
          %p343 = pneg %p80
        $region38: #{tpu_custom_call.1} parent=31 // pred_check_branch
          %345 = sbr.rel (%p343) target = $region40
        $region39: #{tpu_custom_call.1} parent=31 // pred_region
          %s346 = sand.u32 %s34, 1
          %s347 = scalar_lea.sflag [#allocation9], %s346
          %s348 = sand.u32 %s70, 1
          %s349 = smul.addr %s348, 16
          %s350 = scalar_lea.vmem [#allocation8], %s349
          %s352 = ssub.s32 256, 256
          %353 = vsyncadd %s347, %s352
          %s354 = smul.addr %s34, 2
          %s355 = smul.addr %s354, 128
          %s356 = scalar_lea.hbm %s2, %s355
          %s357 = sshll.u32 %s350, 4
          %s358 = int_to_ptr.vmem [resolvable:$true] %s357
          %363 = dma.hbm_to_vmem [thread:$0]  %s356, 256, %s358, %s347, 128, 128, 8
        $region40: #{tpu_custom_call.1} parent=31 // pred_fallthru
          _
        // Predicated region
        $region41: #{tpu_custom_call.1} parent=31 // pred_check
          %p364 = pneg %p106
        $region42: #{tpu_custom_call.1} parent=31 // pred_check_branch
          %366 = sbr.rel (%p364) target = $region44
        $region43: #{tpu_custom_call.1} parent=31 // pred_region
          %s367 = sand.u32 %s34, 1
          %s368 = scalar_lea.sflag [#allocation9], %s367
          %s369 = sand.u32 %s96, 1
          %s370 = smul.addr %s369, 16
          %s371 = scalar_lea.vmem [#allocation10], %s370
          %s373 = ssub.s32 256, 256
          %374 = vsyncadd %s368, %s373
          %s375 = smul.addr %s34, 2
          %s376 = smul.addr %s375, 128
          %s377 = scalar_lea.hbm %s3, %s376
          %s378 = sshll.u32 %s371, 4
          %s379 = int_to_ptr.vmem [resolvable:$true] %s378
          %384 = dma.hbm_to_vmem [thread:$0]  %s377, 256, %s379, %s368, 128, 128, 8
        $region44: #{tpu_custom_call.1} parent=31 // pred_fallthru
          _
      $region32: #{tpu_custom_call.1} parent=5 // pred_fallthru
        _
      %p385 = scmp.le.s32.totalorder 1, %s34
      %p386 = scmp.lt.s32.totalorder %s34, 3
      %p387 = pnand %p385, %p386
      %p388 = pneg %p387
      // Predicated region
      $region45: #{tpu_custom_call.1} parent=5 // pred_check
        _
      $region46: #{tpu_custom_call.1} parent=5 // pred_check_branch
        %390 = sbr.rel (%p387) target = $region48
      $region47: #{tpu_custom_call.1} parent=5 // pred_region
        %s391 = ssub.s32 %s34, 1
        %s392 = sand.u32 %s47, 1
        %s393 = scalar_lea.sflag [#allocation6], %s392
        %s394 = sand.u32 %s47, 1
        %s395 = smul.addr %s394, 8
        %s396 = scalar_lea.vmem [#allocation5], %s395
        // Predicated region
        $region49: #{tpu_custom_call.1} parent=47 // pred_check
          %p397 = pneg %p60
        $region50: #{tpu_custom_call.1} parent=47 // pred_check_branch
          %399 = sbr.rel (%p397) target = $region52
        $region51: #{tpu_custom_call.1} parent=47 // pred_region
          %400 = dma.done %s393, 128
        $region52: #{tpu_custom_call.1} parent=47 // pred_fallthru
          _
        %s401 = sand.u32 %s39, 1
        %s402 = scalar_lea.sflag [#allocation9], %s401
        %s403 = sand.u32 %s73, 1
        %s404 = smul.addr %s403, 16
        %s405 = scalar_lea.vmem [#allocation8], %s404
        // Predicated region
        $region53: #{tpu_custom_call.1} parent=47 // pred_check
          %p406 = pneg %p86
        $region54: #{tpu_custom_call.1} parent=47 // pred_check_branch
          %408 = sbr.rel (%p406) target = $region56
        $region55: #{tpu_custom_call.1} parent=47 // pred_region
          %409 = dma.done %s402, 256
        $region56: #{tpu_custom_call.1} parent=47 // pred_fallthru
          _
        %s410 = sand.u32 %s39, 1
        %s411 = scalar_lea.sflag [#allocation9], %s410
        %s412 = sand.u32 %s99, 1
        %s413 = smul.addr %s412, 16
        %s414 = scalar_lea.vmem [#allocation10], %s413
        // Predicated region
        $region57: #{tpu_custom_call.1} parent=47 // pred_check
          %p415 = pneg %p112
        $region58: #{tpu_custom_call.1} parent=47 // pred_check_branch
          %417 = sbr.rel (%p415) target = $region60
        $region59: #{tpu_custom_call.1} parent=47 // pred_region
          %418 = dma.done %s411, 256
        $region60: #{tpu_custom_call.1} parent=47 // pred_fallthru
          _
        // Predicated region
        $region61: #{tpu_custom_call.1} parent=47 // pred_check
          %p419 = pneg %p133
        $region62: #{tpu_custom_call.1} parent=47 // pred_check_branch
          %421 = sbr.rel (%p419) target = $region64
        $region63: #{tpu_custom_call.1} parent=47 // pred_region
          %422 = dma.done [#allocation12], 512
        $region64: #{tpu_custom_call.1} parent=47 // pred_fallthru
          _
        // Predicated region
        $region65: #{tpu_custom_call.1} parent=47 // pred_check
          %p423 = pneg %p175
        $region66: #{tpu_custom_call.1} parent=47 // pred_check_branch
          %425 = sbr.rel (%p423) target = $region68
        $region67: #{tpu_custom_call.1} parent=47 // pred_region
          %426 = dma.done [#allocation12], 512
        $region68: #{tpu_custom_call.1} parent=47 // pred_fallthru
          _
        %s427 = sand.u32 %s47, 1
        %s428 = scalar_lea.sflag [#allocation6], %s427
        %s429 = sand.u32 %s47, 1
        %s430 = smul.addr %s429, 8
        %s431 = scalar_lea.vmem [#allocation5], %s430
        %p432 = pneg %p60
        %p433 = pneg %p57
        %s434 = sand.u32 %s39, 1
        %s435 = scalar_lea.sflag [#allocation9], %s434
        %s436 = sand.u32 %s73, 1
        %s437 = smul.addr %s436, 16
        %s438 = scalar_lea.vmem [#allocation8], %s437
        %p439 = pneg %p86
        %p440 = pneg %p83
        %s441 = sand.u32 %s39, 1
        %s442 = scalar_lea.sflag [#allocation9], %s441
        %s443 = sand.u32 %s99, 1
        %s444 = smul.addr %s443, 16
        %s445 = scalar_lea.vmem [#allocation10], %s444
        %p446 = pneg %p112
        %p447 = pneg %p109
        %p448 = pneg %p133
        %p449 = pneg %p130
        %p450 = pneg %p154
        %p451 = pneg %p151
        %p452 = pneg %p175
        %p453 = pneg %p172
        %p454 = pneg %p196
        %p455 = pneg %p193
        %p456 = pneg %p222
        %p457 = pneg %p219
        %s458 = sand.u32 %s209, 1
        %s459 = scalar_lea.sflag [#allocation7], %s458
        %s460 = sand.u32 %s209, 1
        %s461 = smul.addr %s460, 8
        %s462 = scalar_lea.vmem [#allocation14], %s461
        %p463 = pneg %p248
        %p464 = pneg %p245
        %s465 = sand.u32 %s39, 1
        %s466 = scalar_lea.sflag [#allocation16], %s465
        %s467 = sand.u32 %s235, 1
        %s468 = smul.addr %s467, 16
        %s469 = scalar_lea.vmem [#allocation15], %s468
        %p470 = pneg %p274
        %p471 = pneg %p271
        %s472 = sand.u32 %s39, 1
        %s473 = scalar_lea.sflag [#allocation16], %s472
        %s474 = sand.u32 %s261, 1
        %s475 = smul.addr %s474, 16
        %s476 = scalar_lea.vmem [#allocation17], %s475
        %v477 = vld [vmem:[%s396] sm:$0xff]
        %vm478 = vcmask 261120
        %479 = vst.msk [vmem:[#allocation2] sm:$0xff] %vm478, %v477
        %v480 = vld [vmem:[%s405] sm:$0xff]
        %v481 = vld [vmem:[%s405 + $0x8] sm:$0xff]
        %482 = vst.msk [vmem:[#allocation2 + $0x8] sm:$0xff] %vm478, %v480
        %483 = vst.msk [vmem:[#allocation2 + $0x10] sm:$0xff] %vm478, %v481
        %v484 = vld [vmem:[%s414] sm:$0xff]
        %v485 = vld [vmem:[%s414 + $0x8] sm:$0xff]
        %486 = vst.msk [vmem:[#allocation2 + $0x18] sm:$0xff] %vm478, %v484
        %487 = vst.msk [vmem:[#allocation2 + $0x20] sm:$0xff] %vm478, %v485
        %v488 = vld [vmem:[#allocation2] sm:$0xff]
        %v489 = vld [vmem:[#allocation2 + $0x8] sm:$0xff]
        %v490 = vld [vmem:[#allocation2 + $0x10] sm:$0xff]
        %v491 = vld [vmem:[#allocation2 + $0x18] sm:$0xff]
        %v492 = vld [vmem:[#allocation2 + $0x20] sm:$0xff]
        %v493 = vld [vmem:[#allocation11] sm:$0xff]
        %v494 = vld [vmem:[#allocation11 + $0x8] sm:$0xff]
        %v495 = vld [vmem:[#allocation11 + $0x10] sm:$0xff]
        %v496 = vld [vmem:[#allocation11 + $0x18] sm:$0xff]
        %v497 = vld [vmem:[%s5] sm:$0x1]
        %v499 = vlaneseq
        %v500 = vshrl.u32 %v499, 7
        %v501 = vsub.s32 0, %v500
        %v502 = vrot.slane %v497, %v501
        %v505 = vsel %vm478, %v488, 0
        %v508 = vsel %vm478, %v489, 0
        %v511 = vsel %vm478, %v490, 0
        %v514 = vsel %vm478, %v491, 0
        %v517 = vsel %vm478, %v492, 0
        %519 = vmatprep.subr.mxu0 0.0
        %520 = vmatpush1.msra.mxu0 %v493
        %521 = vmatprep.subr.mxu0 0.0
        %522 = vmatpush1.msra.mxu0 %v494
        %523 = vmatprep.subr.mxu0 0.0
        %524 = vmatpush1.msra.mxu0 %v495
        %525 = vmatprep.subr.mxu0 0.0
        %526 = vmatpush1.msra.mxu0 %v496
        %527 = vmatprep.subr.mxu0 0.0
        %528 = vmatpush1.msra.mxu0 0.0
        %529 = vmatprep.subr.mxu0 0.0
        %530 = vmatpush1.msra.mxu0 0.0
        %531 = vmatprep.subr.mxu0 0.0
        %532 = vmatpush1.msra.mxu0 0.0
        %533 = vmatprep.subr.mxu0 0.0
        %534 = vmatpush1.msra.mxu0 0.0
        %535 = vmatprep.subr.mxu0 0.0
        %536 = vmatpush1.msra.mxu0 0.0
        %537 = vmatprep.subr.mxu0 0.0
        %538 = vmatpush1.msra.mxu0 0.0
        %539 = vmatprep.subr.mxu0 0.0
        %540 = vmatpush1.msra.mxu0 0.0
        %541 = vmatprep.subr.mxu0 0.0
        %542 = vmatpush1.msra.mxu0 0.0
        %543 = vmatprep.subr.mxu0 0.0
        %544 = vmatpush1.msra.mxu0 0.0
        %545 = vmatprep.subr.mxu0 0.0
        %546 = vmatpush1.msra.mxu0 0.0
        %547 = vmatprep.subr.mxu0 0.0
        %548 = vmatpush1.msra.mxu0 0.0
        %549 = vmatprep.subr.mxu0 0.0
        %550 = vmatpush1.msra.mxu0 0.0
        %551 = vmatprep.subr.mxu0 0.0
        %552 = vmatpush1.msra.mxu0 0.0
        %553 = vmatprep.subr.mxu0 0.0
        %554 = vmatpush1.msra.mxu0 0.0
        %555 = vmatprep.subr.mxu0 0.0
        %556 = vmatpush1.msra.mxu0 0.0
        %557 = vmatprep.subr.mxu0 0.0
        %558 = vmatpush1.msra.mxu0 0.0
        %559 = vmatprep.subr.mxu0 0.0
        %560 = vmatpush1.msra.mxu0 0.0
        %561 = vmatprep.subr.mxu0 0.0
        %562 = vmatpush1.msra.mxu0 0.0
        %563 = vmatprep.subr.mxu0 0.0
        %564 = vmatpush1.msra.mxu0 0.0
        %565 = vmatprep.subr.mxu0 0.0
        %566 = vmatpush1.msra.mxu0 0.0
        %567 = vmatprep.subr.mxu0 0.0
        %568 = vmatpush1.msra.mxu0 0.0
        %569 = vmatprep.subr.mxu0 0.0
        %570 = vmatpush1.msra.mxu0 0.0
        %571 = vmatprep.subr.mxu0 0.0
        %572 = vmatpush1.msra.mxu0 0.0
        %573 = vmatprep.subr.mxu0 0.0
        %574 = vmatpush1.msra.mxu0 0.0
        %575 = vmatprep.subr.mxu0 0.0
        %576 = vmatpush1.msra.mxu0 0.0
        %577 = vmatprep.subr.mxu0 0.0
        %578 = vmatpush1.msra.mxu0 0.0
        %579 = vmatprep.subr.mxu0 0.0
        %580 = vmatpush1.msra.mxu0 0.0
        %581 = vmatprep.subr.mxu0 0.0
        %582 = vmatpush1.msra.mxu0 0.0
        %583 = vmatprep.mubr.f32.mxu0 0.0
        %584 = vmatmul.mubr.f32.gmra.mrb[0].mxu0 %v505
        %v585 = vpop.f32.mrb[0].mxu0
        %v586 = vadd.f32 %v502, %v585
        %v587 = vpop.f32.mrb[0].mxu0
        %588 = vmatprep.mubr.f32.mxu0 0.0
        %589 = vmatmul.mubr.f32.gmra.mrb[0].mxu0 %v508
        %v590 = vpop.f32.mrb[0].mxu0
        %v591 = vadd.f32 %v502, %v590
        %v592 = vpop.f32.mrb[0].mxu0
        %593 = vmatprep.mubr.f32.mxu0 0.0
        %594 = vmatmul.mubr.f32.gmra.mrb[0].mxu0 %v511
        %v595 = vpop.f32.mrb[0].mxu0
        %v596 = vadd.f32 %v502, %v595
        %v597 = vpop.f32.mrb[0].mxu0
        %598 = vmatprep.mubr.f32.mxu0 0.0
        %599 = vmatmul.mubr.f32.gmra.mrb[0].mxu0 %v514
        %v600 = vpop.f32.mrb[0].mxu0
        %v601 = vadd.f32 %v502, %v600
        %v602 = vpop.f32.mrb[0].mxu0
        %603 = vmatprep.mubr.f32.mxu0 0.0
        %604 = vmatmul.mubr.f32.gmra.mrb[0].mxu0 %v517
        %v605 = vpop.f32.mrb[0].mxu0
        %v606 = vadd.f32 %v502, %v605
        %v607 = vpop.f32.mrb[0].mxu0
        %608 = vdwg.mxu0
        %611 = vrot.lane.b32.xlu0 %v591, 96
        %v612 = vpop.permute.xlu0 %611
        %613 = vrot.lane.b32.xlu0 %v596, 96
        %v614 = vpop.permute.xlu0 %613
        %617 = vst.msk [vmem:[%s469] sm:$0xff] %vm478, %v612
        %618 = vst.msk [vmem:[%s469 + $0x8] sm:$0xff] %vm478, %v614
        %621 = vrot.lane.b32.xlu0 %v601, 64
        %v622 = vpop.permute.xlu0 %621
        %623 = vrot.lane.b32.xlu0 %v606, 64
        %v624 = vpop.permute.xlu0 %623
        %627 = vst.msk [vmem:[%s476] sm:$0xff] %vm478, %v622
        %628 = vst.msk [vmem:[%s476 + $0x8] sm:$0xff] %vm478, %v624
        %s629 = sld [smem:[#allocation4 + %s39]]
        %v630 = vlaneseq
        %v631 = vand.u32 %v630, 127
        %v632 = vstv %s629
        %vm633 = vcmp.lt.s32.totalorder %v631, %v632
        %v634 = vsel %vm633, 0.0, -1e+30
        %v635 = vmul.f32 %v586, 0.35355338
        %vm636 = vcmask 64512
        %v638 = vsel %vm636, %v635, 0
        %v640 = vsel %vm636, %v612, 0
        %v642 = vsel %vm636, %v614, 0
        %644 = vmatprep.subr.mxu0 0.0
        %645 = vmatpush1.xpose.msra.mxu0 %v640
        %646 = vmatprep.subr.mxu0 0.0
        %647 = vmatpush1.xpose.msra.mxu0 %v642
        %648 = vmatprep.subr.mxu0 0.0
        %649 = vmatpush1.xpose.msra.mxu0 0.0
        %650 = vmatprep.subr.mxu0 0.0
        %651 = vmatpush1.xpose.msra.mxu0 0.0
        %652 = vmatprep.subr.mxu0 0.0
        %653 = vmatpush1.xpose.msra.mxu0 0.0
        %654 = vmatprep.subr.mxu0 0.0
        %655 = vmatpush1.xpose.msra.mxu0 0.0
        %656 = vmatprep.subr.mxu0 0.0
        %657 = vmatpush1.xpose.msra.mxu0 0.0
        %658 = vmatprep.subr.mxu0 0.0
        %659 = vmatpush1.xpose.msra.mxu0 0.0
        %660 = vmatprep.subr.mxu0 0.0
        %661 = vmatpush1.xpose.msra.mxu0 0.0
        %662 = vmatprep.subr.mxu0 0.0
        %663 = vmatpush1.xpose.msra.mxu0 0.0
        %664 = vmatprep.subr.mxu0 0.0
        %665 = vmatpush1.xpose.msra.mxu0 0.0
        %666 = vmatprep.subr.mxu0 0.0
        %667 = vmatpush1.xpose.msra.mxu0 0.0
        %668 = vmatprep.subr.mxu0 0.0
        %669 = vmatpush1.xpose.msra.mxu0 0.0
        %670 = vmatprep.subr.mxu0 0.0
        %671 = vmatpush1.xpose.msra.mxu0 0.0
        %672 = vmatprep.subr.mxu0 0.0
        %673 = vmatpush1.xpose.msra.mxu0 0.0
        %674 = vmatprep.subr.mxu0 0.0
        %675 = vmatpush1.xpose.msra.mxu0 0.0
        %676 = vmatprep.subr.mxu0 0.0
        %677 = vmatpush1.xpose.msra.mxu0 0.0
        %678 = vmatprep.subr.mxu0 0.0
        %679 = vmatpush1.xpose.msra.mxu0 0.0
        %680 = vmatprep.subr.mxu0 0.0
        %681 = vmatpush1.xpose.msra.mxu0 0.0
        %682 = vmatprep.subr.mxu0 0.0
        %683 = vmatpush1.xpose.msra.mxu0 0.0
        %684 = vmatprep.subr.mxu0 0.0
        %685 = vmatpush1.xpose.msra.mxu0 0.0
        %686 = vmatprep.subr.mxu0 0.0
        %687 = vmatpush1.xpose.msra.mxu0 0.0
        %688 = vmatprep.subr.mxu0 0.0
        %689 = vmatpush1.xpose.msra.mxu0 0.0
        %690 = vmatprep.subr.mxu0 0.0
        %691 = vmatpush1.xpose.msra.mxu0 0.0
        %692 = vmatprep.subr.mxu0 0.0
        %693 = vmatpush1.xpose.msra.mxu0 0.0
        %694 = vmatprep.subr.mxu0 0.0
        %695 = vmatpush1.xpose.msra.mxu0 0.0
        %696 = vmatprep.subr.mxu0 0.0
        %697 = vmatpush1.xpose.msra.mxu0 0.0
        %698 = vmatprep.subr.mxu0 0.0
        %699 = vmatpush1.xpose.msra.mxu0 0.0
        %700 = vmatprep.subr.mxu0 0.0
        %701 = vmatpush1.xpose.msra.mxu0 0.0
        %702 = vmatprep.subr.mxu0 0.0
        %703 = vmatpush1.xpose.msra.mxu0 0.0
        %704 = vmatprep.subr.mxu0 0.0
        %705 = vmatpush1.xpose.msra.mxu0 0.0
        %706 = vmatprep.subr.mxu0 0.0
        %707 = vmatpush1.xpose.msra.mxu0 0.0
        %708 = vmatprep.mubr.f32.mxu0 0.0
        %709 = vmatmul.mubr.f32.gmra.mrb[0].mxu0 %v638
        %v710 = vpop.f32.mrb[0].mxu0
        %v711 = vadd.f32 %v634, %v710
        %v712 = vpop.f32.mrb[0].mxu0
        %713 = vdwg.mxu0
        %vm714 = vcmask 130048
        %v715 = vsel %vm714, %v711, -inf
        %716 = vmax.xlane.f32.xlu0 %v715
        %v717 = vpop.xlane.xlu0 %716
        %v718 = vsub.f32 %v711, %v717
        %v719 = vmul.f32 %v718, 1.442695
        %v720 = vpow.pop %v719
        %v721 = vsel %vm714, %v720, 0.0
        %722 = vadd.xlane.f32.xlu0 %v721
        %v723 = vpop.xlane.xlu0 %722
        %v724 = vrcp.pop %v723
        %v725 = vmul.f32 %v720, %v724
        %v727 = vsel %vm714, %v725, 0
        %729 = vmatprep.subr.mxu0 0.0
        %730 = vmatpush1.msra.mxu0 %v622
        %731 = vmatprep.subr.mxu0 0.0
        %732 = vmatpush1.msra.mxu0 %v624
        %733 = vmatprep.subr.mxu0 0.0
        %734 = vmatpush1.msra.mxu0 0.0
        %735 = vmatprep.subr.mxu0 0.0
        %736 = vmatpush1.msra.mxu0 0.0
        %737 = vmatprep.subr.mxu0 0.0
        %738 = vmatpush1.msra.mxu0 0.0
        %739 = vmatprep.subr.mxu0 0.0
        %740 = vmatpush1.msra.mxu0 0.0
        %741 = vmatprep.subr.mxu0 0.0
        %742 = vmatpush1.msra.mxu0 0.0
        %743 = vmatprep.subr.mxu0 0.0
        %744 = vmatpush1.msra.mxu0 0.0
        %745 = vmatprep.subr.mxu0 0.0
        %746 = vmatpush1.msra.mxu0 0.0
        %747 = vmatprep.subr.mxu0 0.0
        %748 = vmatpush1.msra.mxu0 0.0
        %749 = vmatprep.subr.mxu0 0.0
        %750 = vmatpush1.msra.mxu0 0.0
        %751 = vmatprep.subr.mxu0 0.0
        %752 = vmatpush1.msra.mxu0 0.0
        %753 = vmatprep.subr.mxu0 0.0
        %754 = vmatpush1.msra.mxu0 0.0
        %755 = vmatprep.subr.mxu0 0.0
        %756 = vmatpush1.msra.mxu0 0.0
        %757 = vmatprep.subr.mxu0 0.0
        %758 = vmatpush1.msra.mxu0 0.0
        %759 = vmatprep.subr.mxu0 0.0
        %760 = vmatpush1.msra.mxu0 0.0
        %761 = vmatprep.subr.mxu0 0.0
        %762 = vmatpush1.msra.mxu0 0.0
        %763 = vmatprep.subr.mxu0 0.0
        %764 = vmatpush1.msra.mxu0 0.0
        %765 = vmatprep.subr.mxu0 0.0
        %766 = vmatpush1.msra.mxu0 0.0
        %767 = vmatprep.subr.mxu0 0.0
        %768 = vmatpush1.msra.mxu0 0.0
        %769 = vmatprep.subr.mxu0 0.0
        %770 = vmatpush1.msra.mxu0 0.0
        %771 = vmatprep.subr.mxu0 0.0
        %772 = vmatpush1.msra.mxu0 0.0
        %773 = vmatprep.subr.mxu0 0.0
        %774 = vmatpush1.msra.mxu0 0.0
        %775 = vmatprep.subr.mxu0 0.0
        %776 = vmatpush1.msra.mxu0 0.0
        %777 = vmatprep.subr.mxu0 0.0
        %778 = vmatpush1.msra.mxu0 0.0
        %779 = vmatprep.subr.mxu0 0.0
        %780 = vmatpush1.msra.mxu0 0.0
        %781 = vmatprep.subr.mxu0 0.0
        %782 = vmatpush1.msra.mxu0 0.0
        %783 = vmatprep.subr.mxu0 0.0
        %784 = vmatpush1.msra.mxu0 0.0
        %785 = vmatprep.subr.mxu0 0.0
        %786 = vmatpush1.msra.mxu0 0.0
        %787 = vmatprep.subr.mxu0 0.0
        %788 = vmatpush1.msra.mxu0 0.0
        %789 = vmatprep.subr.mxu0 0.0
        %790 = vmatpush1.msra.mxu0 0.0
        %791 = vmatprep.subr.mxu0 0.0
        %792 = vmatpush1.msra.mxu0 0.0
        %793 = vmatprep.mubr.f32.mxu0 0.0
        %794 = vmatmul.mubr.f32.gmra.mrb[0].mxu0 %v727
        %v795 = vpop.f32.mrb[0].mxu0
        %v796 = vadd.f32 0.0, %v795
        %v797 = vpop.f32.mrb[0].mxu0
        %798 = vdwg.mxu0
        %v799 = vld [vmem:[#allocation13] sm:$0xff]
        %800 = vrot.lane.b32.xlu0 %v635, 120
        %v801 = vpop.permute.xlu0 %800
        %802 = vrot.lane.b32.xlu0 %v591, 88
        %v803 = vpop.permute.xlu0 %802
        %804 = vrot.lane.b32.xlu0 %v596, 88
        %v805 = vpop.permute.xlu0 %804
        %v806 = vsel %vm636, %v801, 0
        %v808 = vsel %vm636, %v803, 0
        %v810 = vsel %vm636, %v805, 0
        %812 = vmatprep.subr.mxu0 0.0
        %813 = vmatpush1.xpose.msra.mxu0 %v808
        %814 = vmatprep.subr.mxu0 0.0
        %815 = vmatpush1.xpose.msra.mxu0 %v810
        %816 = vmatprep.subr.mxu0 0.0
        %817 = vmatpush1.xpose.msra.mxu0 0.0
        %818 = vmatprep.subr.mxu0 0.0
        %819 = vmatpush1.xpose.msra.mxu0 0.0
        %820 = vmatprep.subr.mxu0 0.0
        %821 = vmatpush1.xpose.msra.mxu0 0.0
        %822 = vmatprep.subr.mxu0 0.0
        %823 = vmatpush1.xpose.msra.mxu0 0.0
        %824 = vmatprep.subr.mxu0 0.0
        %825 = vmatpush1.xpose.msra.mxu0 0.0
        %826 = vmatprep.subr.mxu0 0.0
        %827 = vmatpush1.xpose.msra.mxu0 0.0
        %828 = vmatprep.subr.mxu0 0.0
        %829 = vmatpush1.xpose.msra.mxu0 0.0
        %830 = vmatprep.subr.mxu0 0.0
        %831 = vmatpush1.xpose.msra.mxu0 0.0
        %832 = vmatprep.subr.mxu0 0.0
        %833 = vmatpush1.xpose.msra.mxu0 0.0
        %834 = vmatprep.subr.mxu0 0.0
        %835 = vmatpush1.xpose.msra.mxu0 0.0
        %836 = vmatprep.subr.mxu0 0.0
        %837 = vmatpush1.xpose.msra.mxu0 0.0
        %838 = vmatprep.subr.mxu0 0.0
        %839 = vmatpush1.xpose.msra.mxu0 0.0
        %840 = vmatprep.subr.mxu0 0.0
        %841 = vmatpush1.xpose.msra.mxu0 0.0
        %842 = vmatprep.subr.mxu0 0.0
        %843 = vmatpush1.xpose.msra.mxu0 0.0
        %844 = vmatprep.subr.mxu0 0.0
        %845 = vmatpush1.xpose.msra.mxu0 0.0
        %846 = vmatprep.subr.mxu0 0.0
        %847 = vmatpush1.xpose.msra.mxu0 0.0
        %848 = vmatprep.subr.mxu0 0.0
        %849 = vmatpush1.xpose.msra.mxu0 0.0
        %850 = vmatprep.subr.mxu0 0.0
        %851 = vmatpush1.xpose.msra.mxu0 0.0
        %852 = vmatprep.subr.mxu0 0.0
        %853 = vmatpush1.xpose.msra.mxu0 0.0
        %854 = vmatprep.subr.mxu0 0.0
        %855 = vmatpush1.xpose.msra.mxu0 0.0
        %856 = vmatprep.subr.mxu0 0.0
        %857 = vmatpush1.xpose.msra.mxu0 0.0
        %858 = vmatprep.subr.mxu0 0.0
        %859 = vmatpush1.xpose.msra.mxu0 0.0
        %860 = vmatprep.subr.mxu0 0.0
        %861 = vmatpush1.xpose.msra.mxu0 0.0
        %862 = vmatprep.subr.mxu0 0.0
        %863 = vmatpush1.xpose.msra.mxu0 0.0
        %864 = vmatprep.subr.mxu0 0.0
        %865 = vmatpush1.xpose.msra.mxu0 0.0
        %866 = vmatprep.subr.mxu0 0.0
        %867 = vmatpush1.xpose.msra.mxu0 0.0
        %868 = vmatprep.subr.mxu0 0.0
        %869 = vmatpush1.xpose.msra.mxu0 0.0
        %870 = vmatprep.subr.mxu0 0.0
        %871 = vmatpush1.xpose.msra.mxu0 0.0
        %872 = vmatprep.subr.mxu0 0.0
        %873 = vmatpush1.xpose.msra.mxu0 0.0
        %874 = vmatprep.subr.mxu0 0.0
        %875 = vmatpush1.xpose.msra.mxu0 0.0
        %876 = vmatprep.mubr.f32.mxu0 0.0
        %877 = vmatmul.mubr.f32.gmra.mrb[0].mxu0 %v806
        %v878 = vpop.f32.mrb[0].mxu0
        %v879 = vadd.f32 %v634, %v878
        %v880 = vpop.f32.mrb[0].mxu0
        %881 = vdwg.mxu0
        %v882 = vsel %vm714, %v879, -inf
        %883 = vmax.xlane.f32.xlu0 %v882
        %v884 = vpop.xlane.xlu0 %883
        %v885 = vsub.f32 %v879, %v884
        %v886 = vmul.f32 %v885, 1.442695
        %v887 = vpow.pop %v886
        %v888 = vsel %vm714, %v887, 0.0
        %889 = vadd.xlane.f32.xlu0 %v888
        %v890 = vpop.xlane.xlu0 %889
        %v891 = vrcp.pop %v890
        %v892 = vmul.f32 %v887, %v891
        %893 = vrot.lane.b32.xlu0 %v601, 56
        %v894 = vpop.permute.xlu0 %893
        %895 = vrot.lane.b32.xlu0 %v606, 56
        %v896 = vpop.permute.xlu0 %895
        %v900 = vsel %vm714, %v892, 0
        %902 = vmatprep.subr.mxu0 0.0
        %903 = vmatpush1.msra.mxu0 %v894
        %904 = vmatprep.subr.mxu0 0.0
        %905 = vmatpush1.msra.mxu0 %v896
        %906 = vmatprep.subr.mxu0 0.0
        %907 = vmatpush1.msra.mxu0 0.0
        %908 = vmatprep.subr.mxu0 0.0
        %909 = vmatpush1.msra.mxu0 0.0
        %910 = vmatprep.subr.mxu0 0.0
        %911 = vmatpush1.msra.mxu0 0.0
        %912 = vmatprep.subr.mxu0 0.0
        %913 = vmatpush1.msra.mxu0 0.0
        %914 = vmatprep.subr.mxu0 0.0
        %915 = vmatpush1.msra.mxu0 0.0
        %916 = vmatprep.subr.mxu0 0.0
        %917 = vmatpush1.msra.mxu0 0.0
        %918 = vmatprep.subr.mxu0 0.0
        %919 = vmatpush1.msra.mxu0 0.0
        %920 = vmatprep.subr.mxu0 0.0
        %921 = vmatpush1.msra.mxu0 0.0
        %922 = vmatprep.subr.mxu0 0.0
        %923 = vmatpush1.msra.mxu0 0.0
        %924 = vmatprep.subr.mxu0 0.0
        %925 = vmatpush1.msra.mxu0 0.0
        %926 = vmatprep.subr.mxu0 0.0
        %927 = vmatpush1.msra.mxu0 0.0
        %928 = vmatprep.subr.mxu0 0.0
        %929 = vmatpush1.msra.mxu0 0.0
        %930 = vmatprep.subr.mxu0 0.0
        %931 = vmatpush1.msra.mxu0 0.0
        %932 = vmatprep.subr.mxu0 0.0
        %933 = vmatpush1.msra.mxu0 0.0
        %934 = vmatprep.subr.mxu0 0.0
        %935 = vmatpush1.msra.mxu0 0.0
        %936 = vmatprep.subr.mxu0 0.0
        %937 = vmatpush1.msra.mxu0 0.0
        %938 = vmatprep.subr.mxu0 0.0
        %939 = vmatpush1.msra.mxu0 0.0
        %940 = vmatprep.subr.mxu0 0.0
        %941 = vmatpush1.msra.mxu0 0.0
        %942 = vmatprep.subr.mxu0 0.0
        %943 = vmatpush1.msra.mxu0 0.0
        %944 = vmatprep.subr.mxu0 0.0
        %945 = vmatpush1.msra.mxu0 0.0
        %946 = vmatprep.subr.mxu0 0.0
        %947 = vmatpush1.msra.mxu0 0.0
        %948 = vmatprep.subr.mxu0 0.0
        %949 = vmatpush1.msra.mxu0 0.0
        %950 = vmatprep.subr.mxu0 0.0
        %951 = vmatpush1.msra.mxu0 0.0
        %952 = vmatprep.subr.mxu0 0.0
        %953 = vmatpush1.msra.mxu0 0.0
        %954 = vmatprep.subr.mxu0 0.0
        %955 = vmatpush1.msra.mxu0 0.0
        %956 = vmatprep.subr.mxu0 0.0
        %957 = vmatpush1.msra.mxu0 0.0
        %958 = vmatprep.subr.mxu0 0.0
        %959 = vmatpush1.msra.mxu0 0.0
        %960 = vmatprep.subr.mxu0 0.0
        %961 = vmatpush1.msra.mxu0 0.0
        %962 = vmatprep.subr.mxu0 0.0
        %963 = vmatpush1.msra.mxu0 0.0
        %964 = vmatprep.subr.mxu0 0.0
        %965 = vmatpush1.msra.mxu0 0.0
        %966 = vmatprep.mubr.f32.mxu0 0.0
        %967 = vmatmul.mubr.f32.gmra.mrb[0].mxu0 %v900
        %v968 = vpop.f32.mrb[0].mxu0
        %v969 = vadd.f32 0.0, %v968
        %v970 = vpop.f32.mrb[0].mxu0
        %971 = vdwg.mxu0
        %v972 = vld [vmem:[#allocation13 + $0x8] sm:$0xff]
        %v974 = vsel %vm636, %v969, 0
        %976 = vmatprep.subr.mxu0 0.0
        %977 = vmatpush1.msra.mxu0 %v972
        %978 = vmatprep.subr.mxu0 0.0
        %979 = vmatpush1.msra.mxu0 0.0
        %980 = vmatprep.subr.mxu0 0.0
        %981 = vmatpush1.msra.mxu0 0.0
        %982 = vmatprep.subr.mxu0 0.0
        %983 = vmatpush1.msra.mxu0 0.0
        %984 = vmatprep.subr.mxu0 0.0
        %985 = vmatpush1.msra.mxu0 0.0
        %986 = vmatprep.subr.mxu0 0.0
        %987 = vmatpush1.msra.mxu0 0.0
        %988 = vmatprep.subr.mxu0 0.0
        %989 = vmatpush1.msra.mxu0 0.0
        %990 = vmatprep.subr.mxu0 0.0
        %991 = vmatpush1.msra.mxu0 0.0
        %992 = vmatprep.subr.mxu0 0.0
        %993 = vmatpush1.msra.mxu0 0.0
        %994 = vmatprep.subr.mxu0 0.0
        %995 = vmatpush1.msra.mxu0 0.0
        %996 = vmatprep.subr.mxu0 0.0
        %997 = vmatpush1.msra.mxu0 0.0
        %998 = vmatprep.subr.mxu0 0.0
        %999 = vmatpush1.msra.mxu0 0.0
        %1000 = vmatprep.subr.mxu0 0.0
        %1001 = vmatpush1.msra.mxu0 0.0
        %1002 = vmatprep.subr.mxu0 0.0
        %1003 = vmatpush1.msra.mxu0 0.0
        %1004 = vmatprep.subr.mxu0 0.0
        %1005 = vmatpush1.msra.mxu0 0.0
        %1006 = vmatprep.subr.mxu0 0.0
        %1007 = vmatpush1.msra.mxu0 0.0
        %1008 = vmatprep.subr.mxu0 0.0
        %1009 = vmatpush1.msra.mxu0 0.0
        %1010 = vmatprep.subr.mxu0 0.0
        %1011 = vmatpush1.msra.mxu0 0.0
        %1012 = vmatprep.subr.mxu0 0.0
        %1013 = vmatpush1.msra.mxu0 0.0
        %1014 = vmatprep.subr.mxu0 0.0
        %1015 = vmatpush1.msra.mxu0 0.0
        %1016 = vmatprep.subr.mxu0 0.0
        %1017 = vmatpush1.msra.mxu0 0.0
        %1018 = vmatprep.subr.mxu0 0.0
        %1019 = vmatpush1.msra.mxu0 0.0
        %1020 = vmatprep.subr.mxu0 0.0
        %1021 = vmatpush1.msra.mxu0 0.0
        %1022 = vmatprep.subr.mxu0 0.0
        %1023 = vmatpush1.msra.mxu0 0.0
        %1024 = vmatprep.subr.mxu0 0.0
        %1025 = vmatpush1.msra.mxu0 0.0
        %1026 = vmatprep.subr.mxu0 0.0
        %1027 = vmatpush1.msra.mxu0 0.0
        %1028 = vmatprep.subr.mxu0 0.0
        %1029 = vmatpush1.msra.mxu0 0.0
        %1030 = vmatprep.subr.mxu0 0.0
        %1031 = vmatpush1.msra.mxu0 0.0
        %1032 = vmatprep.subr.mxu0 0.0
        %1033 = vmatpush1.msra.mxu0 0.0
        %1034 = vmatprep.subr.mxu0 0.0
        %1035 = vmatpush1.msra.mxu0 0.0
        %1036 = vmatprep.subr.mxu0 0.0
        %1037 = vmatpush1.msra.mxu0 0.0
        %1038 = vmatprep.subr.mxu0 0.0
        %1039 = vmatpush1.msra.mxu0 0.0
        %1040 = vmatprep.mubr.f32.mxu0 0.0
        %1041 = vmatmul.mubr.f32.gmra.mrb[0].mxu0 %v974
        %v1042 = vpop.f32.mrb[0].mxu0
        %v1043 = vadd.f32 0.0, %v1042
        %v1044 = vpop.f32.mrb[0].mxu0
        %1045 = vdwg.mxu0
        %v1047 = vsel %vm636, %v796, 0
        %1049 = vmatprep.subr.mxu0 0.0
        %1050 = vmatpush1.msra.mxu0 %v799
        %1051 = vmatprep.subr.mxu0 0.0
        %1052 = vmatpush1.msra.mxu0 0.0
        %1053 = vmatprep.subr.mxu0 0.0
        %1054 = vmatpush1.msra.mxu0 0.0
        %1055 = vmatprep.subr.mxu0 0.0
        %1056 = vmatpush1.msra.mxu0 0.0
        %1057 = vmatprep.subr.mxu0 0.0
        %1058 = vmatpush1.msra.mxu0 0.0
        %1059 = vmatprep.subr.mxu0 0.0
        %1060 = vmatpush1.msra.mxu0 0.0
        %1061 = vmatprep.subr.mxu0 0.0
        %1062 = vmatpush1.msra.mxu0 0.0
        %1063 = vmatprep.subr.mxu0 0.0
        %1064 = vmatpush1.msra.mxu0 0.0
        %1065 = vmatprep.subr.mxu0 0.0
        %1066 = vmatpush1.msra.mxu0 0.0
        %1067 = vmatprep.subr.mxu0 0.0
        %1068 = vmatpush1.msra.mxu0 0.0
        %1069 = vmatprep.subr.mxu0 0.0
        %1070 = vmatpush1.msra.mxu0 0.0
        %1071 = vmatprep.subr.mxu0 0.0
        %1072 = vmatpush1.msra.mxu0 0.0
        %1073 = vmatprep.subr.mxu0 0.0
        %1074 = vmatpush1.msra.mxu0 0.0
        %1075 = vmatprep.subr.mxu0 0.0
        %1076 = vmatpush1.msra.mxu0 0.0
        %1077 = vmatprep.subr.mxu0 0.0
        %1078 = vmatpush1.msra.mxu0 0.0
        %1079 = vmatprep.subr.mxu0 0.0
        %1080 = vmatpush1.msra.mxu0 0.0
        %1081 = vmatprep.subr.mxu0 0.0
        %1082 = vmatpush1.msra.mxu0 0.0
        %1083 = vmatprep.subr.mxu0 0.0
        %1084 = vmatpush1.msra.mxu0 0.0
        %1085 = vmatprep.subr.mxu0 0.0
        %1086 = vmatpush1.msra.mxu0 0.0
        %1087 = vmatprep.subr.mxu0 0.0
        %1088 = vmatpush1.msra.mxu0 0.0
        %1089 = vmatprep.subr.mxu0 0.0
        %1090 = vmatpush1.msra.mxu0 0.0
        %1091 = vmatprep.subr.mxu0 0.0
        %1092 = vmatpush1.msra.mxu0 0.0
        %1093 = vmatprep.subr.mxu0 0.0
        %1094 = vmatpush1.msra.mxu0 0.0
        %1095 = vmatprep.subr.mxu0 0.0
        %1096 = vmatpush1.msra.mxu0 0.0
        %1097 = vmatprep.subr.mxu0 0.0
        %1098 = vmatpush1.msra.mxu0 0.0
        %1099 = vmatprep.subr.mxu0 0.0
        %1100 = vmatpush1.msra.mxu0 0.0
        %1101 = vmatprep.subr.mxu0 0.0
        %1102 = vmatpush1.msra.mxu0 0.0
        %1103 = vmatprep.subr.mxu0 0.0
        %1104 = vmatpush1.msra.mxu0 0.0
        %1105 = vmatprep.subr.mxu0 0.0
        %1106 = vmatpush1.msra.mxu0 0.0
        %1107 = vmatprep.subr.mxu0 0.0
        %1108 = vmatpush1.msra.mxu0 0.0
        %1109 = vmatprep.subr.mxu0 0.0
        %1110 = vmatpush1.msra.mxu0 0.0
        %1111 = vmatprep.subr.mxu0 0.0
        %1112 = vmatpush1.msra.mxu0 0.0
        %1113 = vmatprep.mubr.f32.mxu0 0.0
        %1114 = vmatmul.mubr.f32.gmra.mrb[0].mxu0 %v1047
        %v1115 = vpop.f32.mrb[0].mxu0
        %v1116 = vadd.f32 %v1043, %v1115
        %v1117 = vpop.f32.mrb[0].mxu0
        %1118 = vdwg.mxu0
        %1119 = vrot.lane.b32.xlu0 %v635, 112
        %v1120 = vpop.permute.xlu0 %1119
        %1121 = vrot.lane.b32.xlu0 %v591, 80
        %v1122 = vpop.permute.xlu0 %1121
        %1123 = vrot.lane.b32.xlu0 %v596, 80
        %v1124 = vpop.permute.xlu0 %1123
        %v1125 = vsel %vm636, %v1120, 0
        %v1127 = vsel %vm636, %v1122, 0
        %v1129 = vsel %vm636, %v1124, 0
        %1131 = vmatprep.subr.mxu0 0.0
        %1132 = vmatpush1.xpose.msra.mxu0 %v1127
        %1133 = vmatprep.subr.mxu0 0.0
        %1134 = vmatpush1.xpose.msra.mxu0 %v1129
        %1135 = vmatprep.subr.mxu0 0.0
        %1136 = vmatpush1.xpose.msra.mxu0 0.0
        %1137 = vmatprep.subr.mxu0 0.0
        %1138 = vmatpush1.xpose.msra.mxu0 0.0
        %1139 = vmatprep.subr.mxu0 0.0
        %1140 = vmatpush1.xpose.msra.mxu0 0.0
        %1141 = vmatprep.subr.mxu0 0.0
        %1142 = vmatpush1.xpose.msra.mxu0 0.0
        %1143 = vmatprep.subr.mxu0 0.0
        %1144 = vmatpush1.xpose.msra.mxu0 0.0
        %1145 = vmatprep.subr.mxu0 0.0
        %1146 = vmatpush1.xpose.msra.mxu0 0.0
        %1147 = vmatprep.subr.mxu0 0.0
        %1148 = vmatpush1.xpose.msra.mxu0 0.0
        %1149 = vmatprep.subr.mxu0 0.0
        %1150 = vmatpush1.xpose.msra.mxu0 0.0
        %1151 = vmatprep.subr.mxu0 0.0
        %1152 = vmatpush1.xpose.msra.mxu0 0.0
        %1153 = vmatprep.subr.mxu0 0.0
        %1154 = vmatpush1.xpose.msra.mxu0 0.0
        %1155 = vmatprep.subr.mxu0 0.0
        %1156 = vmatpush1.xpose.msra.mxu0 0.0
        %1157 = vmatprep.subr.mxu0 0.0
        %1158 = vmatpush1.xpose.msra.mxu0 0.0
        %1159 = vmatprep.subr.mxu0 0.0
        %1160 = vmatpush1.xpose.msra.mxu0 0.0
        %1161 = vmatprep.subr.mxu0 0.0
        %1162 = vmatpush1.xpose.msra.mxu0 0.0
        %1163 = vmatprep.subr.mxu0 0.0
        %1164 = vmatpush1.xpose.msra.mxu0 0.0
        %1165 = vmatprep.subr.mxu0 0.0
        %1166 = vmatpush1.xpose.msra.mxu0 0.0
        %1167 = vmatprep.subr.mxu0 0.0
        %1168 = vmatpush1.xpose.msra.mxu0 0.0
        %1169 = vmatprep.subr.mxu0 0.0
        %1170 = vmatpush1.xpose.msra.mxu0 0.0
        %1171 = vmatprep.subr.mxu0 0.0
        %1172 = vmatpush1.xpose.msra.mxu0 0.0
        %1173 = vmatprep.subr.mxu0 0.0
        %1174 = vmatpush1.xpose.msra.mxu0 0.0
        %1175 = vmatprep.subr.mxu0 0.0
        %1176 = vmatpush1.xpose.msra.mxu0 0.0
        %1177 = vmatprep.subr.mxu0 0.0
        %1178 = vmatpush1.xpose.msra.mxu0 0.0
        %1179 = vmatprep.subr.mxu0 0.0
        %1180 = vmatpush1.xpose.msra.mxu0 0.0
        %1181 = vmatprep.subr.mxu0 0.0
        %1182 = vmatpush1.xpose.msra.mxu0 0.0
        %1183 = vmatprep.subr.mxu0 0.0
        %1184 = vmatpush1.xpose.msra.mxu0 0.0
        %1185 = vmatprep.subr.mxu0 0.0
        %1186 = vmatpush1.xpose.msra.mxu0 0.0
        %1187 = vmatprep.subr.mxu0 0.0
        %1188 = vmatpush1.xpose.msra.mxu0 0.0
        %1189 = vmatprep.subr.mxu0 0.0
        %1190 = vmatpush1.xpose.msra.mxu0 0.0
        %1191 = vmatprep.subr.mxu0 0.0
        %1192 = vmatpush1.xpose.msra.mxu0 0.0
        %1193 = vmatprep.subr.mxu0 0.0
        %1194 = vmatpush1.xpose.msra.mxu0 0.0
        %1195 = vmatprep.mubr.f32.mxu0 0.0
        %1196 = vmatmul.mubr.f32.gmra.mrb[0].mxu0 %v1125
        %v1197 = vpop.f32.mrb[0].mxu0
        %v1198 = vadd.f32 %v634, %v1197
        %v1199 = vpop.f32.mrb[0].mxu0
        %1200 = vdwg.mxu0
        %v1201 = vsel %vm714, %v1198, -inf
        %1202 = vmax.xlane.f32.xlu0 %v1201
        %v1203 = vpop.xlane.xlu0 %1202
        %v1204 = vsub.f32 %v1198, %v1203
        %v1205 = vmul.f32 %v1204, 1.442695
        %v1206 = vpow.pop %v1205
        %v1207 = vsel %vm714, %v1206, 0.0
        %1208 = vadd.xlane.f32.xlu0 %v1207
        %v1209 = vpop.xlane.xlu0 %1208
        %v1210 = vrcp.pop %v1209
        %v1211 = vmul.f32 %v1206, %v1210
        %1212 = vrot.lane.b32.xlu0 %v601, 48
        %v1213 = vpop.permute.xlu0 %1212
        %1214 = vrot.lane.b32.xlu0 %v606, 48
        %v1215 = vpop.permute.xlu0 %1214
        %v1219 = vsel %vm714, %v1211, 0
        %1221 = vmatprep.subr.mxu0 0.0
        %1222 = vmatpush1.msra.mxu0 %v1213
        %1223 = vmatprep.subr.mxu0 0.0
        %1224 = vmatpush1.msra.mxu0 %v1215
        %1225 = vmatprep.subr.mxu0 0.0
        %1226 = vmatpush1.msra.mxu0 0.0
        %1227 = vmatprep.subr.mxu0 0.0
        %1228 = vmatpush1.msra.mxu0 0.0
        %1229 = vmatprep.subr.mxu0 0.0
        %1230 = vmatpush1.msra.mxu0 0.0
        %1231 = vmatprep.subr.mxu0 0.0
        %1232 = vmatpush1.msra.mxu0 0.0
        %1233 = vmatprep.subr.mxu0 0.0
        %1234 = vmatpush1.msra.mxu0 0.0
        %1235 = vmatprep.subr.mxu0 0.0
        %1236 = vmatpush1.msra.mxu0 0.0
        %1237 = vmatprep.subr.mxu0 0.0
        %1238 = vmatpush1.msra.mxu0 0.0
        %1239 = vmatprep.subr.mxu0 0.0
        %1240 = vmatpush1.msra.mxu0 0.0
        %1241 = vmatprep.subr.mxu0 0.0
        %1242 = vmatpush1.msra.mxu0 0.0
        %1243 = vmatprep.subr.mxu0 0.0
        %1244 = vmatpush1.msra.mxu0 0.0
        %1245 = vmatprep.subr.mxu0 0.0
        %1246 = vmatpush1.msra.mxu0 0.0
        %1247 = vmatprep.subr.mxu0 0.0
        %1248 = vmatpush1.msra.mxu0 0.0
        %1249 = vmatprep.subr.mxu0 0.0
        %1250 = vmatpush1.msra.mxu0 0.0
        %1251 = vmatprep.subr.mxu0 0.0
        %1252 = vmatpush1.msra.mxu0 0.0
        %1253 = vmatprep.subr.mxu0 0.0
        %1254 = vmatpush1.msra.mxu0 0.0
        %1255 = vmatprep.subr.mxu0 0.0
        %1256 = vmatpush1.msra.mxu0 0.0
        %1257 = vmatprep.subr.mxu0 0.0
        %1258 = vmatpush1.msra.mxu0 0.0
        %1259 = vmatprep.subr.mxu0 0.0
        %1260 = vmatpush1.msra.mxu0 0.0
        %1261 = vmatprep.subr.mxu0 0.0
        %1262 = vmatpush1.msra.mxu0 0.0
        %1263 = vmatprep.subr.mxu0 0.0
        %1264 = vmatpush1.msra.mxu0 0.0
        %1265 = vmatprep.subr.mxu0 0.0
        %1266 = vmatpush1.msra.mxu0 0.0
        %1267 = vmatprep.subr.mxu0 0.0
        %1268 = vmatpush1.msra.mxu0 0.0
        %1269 = vmatprep.subr.mxu0 0.0
        %1270 = vmatpush1.msra.mxu0 0.0
        %1271 = vmatprep.subr.mxu0 0.0
        %1272 = vmatpush1.msra.mxu0 0.0
        %1273 = vmatprep.subr.mxu0 0.0
        %1274 = vmatpush1.msra.mxu0 0.0
        %1275 = vmatprep.subr.mxu0 0.0
        %1276 = vmatpush1.msra.mxu0 0.0
        %1277 = vmatprep.subr.mxu0 0.0
        %1278 = vmatpush1.msra.mxu0 0.0
        %1279 = vmatprep.subr.mxu0 0.0
        %1280 = vmatpush1.msra.mxu0 0.0
        %1281 = vmatprep.subr.mxu0 0.0
        %1282 = vmatpush1.msra.mxu0 0.0
        %1283 = vmatprep.subr.mxu0 0.0
        %1284 = vmatpush1.msra.mxu0 0.0
        %1285 = vmatprep.mubr.f32.mxu0 0.0
        %1286 = vmatmul.mubr.f32.gmra.mrb[0].mxu0 %v1219
        %v1287 = vpop.f32.mrb[0].mxu0
        %v1288 = vadd.f32 0.0, %v1287
        %v1289 = vpop.f32.mrb[0].mxu0
        %1290 = vdwg.mxu0
        %v1291 = vld [vmem:[#allocation13 + $0x10] sm:$0xff]
        %v1293 = vsel %vm636, %v1288, 0
        %1295 = vmatprep.subr.mxu0 0.0
        %1296 = vmatpush1.msra.mxu0 %v1291
        %1297 = vmatprep.subr.mxu0 0.0
        %1298 = vmatpush1.msra.mxu0 0.0
        %1299 = vmatprep.subr.mxu0 0.0
        %1300 = vmatpush1.msra.mxu0 0.0
        %1301 = vmatprep.subr.mxu0 0.0
        %1302 = vmatpush1.msra.mxu0 0.0
        %1303 = vmatprep.subr.mxu0 0.0
        %1304 = vmatpush1.msra.mxu0 0.0
        %1305 = vmatprep.subr.mxu0 0.0
        %1306 = vmatpush1.msra.mxu0 0.0
        %1307 = vmatprep.subr.mxu0 0.0
        %1308 = vmatpush1.msra.mxu0 0.0
        %1309 = vmatprep.subr.mxu0 0.0
        %1310 = vmatpush1.msra.mxu0 0.0
        %1311 = vmatprep.subr.mxu0 0.0
        %1312 = vmatpush1.msra.mxu0 0.0
        %1313 = vmatprep.subr.mxu0 0.0
        %1314 = vmatpush1.msra.mxu0 0.0
        %1315 = vmatprep.subr.mxu0 0.0
        %1316 = vmatpush1.msra.mxu0 0.0
        %1317 = vmatprep.subr.mxu0 0.0
        %1318 = vmatpush1.msra.mxu0 0.0
        %1319 = vmatprep.subr.mxu0 0.0
        %1320 = vmatpush1.msra.mxu0 0.0
        %1321 = vmatprep.subr.mxu0 0.0
        %1322 = vmatpush1.msra.mxu0 0.0
        %1323 = vmatprep.subr.mxu0 0.0
        %1324 = vmatpush1.msra.mxu0 0.0
        %1325 = vmatprep.subr.mxu0 0.0
        %1326 = vmatpush1.msra.mxu0 0.0
        %1327 = vmatprep.subr.mxu0 0.0
        %1328 = vmatpush1.msra.mxu0 0.0
        %1329 = vmatprep.subr.mxu0 0.0
        %1330 = vmatpush1.msra.mxu0 0.0
        %1331 = vmatprep.subr.mxu0 0.0
        %1332 = vmatpush1.msra.mxu0 0.0
        %1333 = vmatprep.subr.mxu0 0.0
        %1334 = vmatpush1.msra.mxu0 0.0
        %1335 = vmatprep.subr.mxu0 0.0
        %1336 = vmatpush1.msra.mxu0 0.0
        %1337 = vmatprep.subr.mxu0 0.0
        %1338 = vmatpush1.msra.mxu0 0.0
        %1339 = vmatprep.subr.mxu0 0.0
        %1340 = vmatpush1.msra.mxu0 0.0
        %1341 = vmatprep.subr.mxu0 0.0
        %1342 = vmatpush1.msra.mxu0 0.0
        %1343 = vmatprep.subr.mxu0 0.0
        %1344 = vmatpush1.msra.mxu0 0.0
        %1345 = vmatprep.subr.mxu0 0.0
        %1346 = vmatpush1.msra.mxu0 0.0
        %1347 = vmatprep.subr.mxu0 0.0
        %1348 = vmatpush1.msra.mxu0 0.0
        %1349 = vmatprep.subr.mxu0 0.0
        %1350 = vmatpush1.msra.mxu0 0.0
        %1351 = vmatprep.subr.mxu0 0.0
        %1352 = vmatpush1.msra.mxu0 0.0
        %1353 = vmatprep.subr.mxu0 0.0
        %1354 = vmatpush1.msra.mxu0 0.0
        %1355 = vmatprep.subr.mxu0 0.0
        %1356 = vmatpush1.msra.mxu0 0.0
        %1357 = vmatprep.subr.mxu0 0.0
        %1358 = vmatpush1.msra.mxu0 0.0
        %1359 = vmatprep.mubr.f32.mxu0 0.0
        %1360 = vmatmul.mubr.f32.gmra.mrb[0].mxu0 %v1293
        %v1361 = vpop.f32.mrb[0].mxu0
        %v1362 = vadd.f32 0.0, %v1361
        %v1363 = vpop.f32.mrb[0].mxu0
        %1364 = vdwg.mxu0
        %v1365 = vadd.f32 %v1116, %v1362
        %1366 = vrot.lane.b32.xlu0 %v635, 104
        %v1367 = vpop.permute.xlu0 %1366
        %1368 = vrot.lane.b32.xlu0 %v591, 72
        %v1369 = vpop.permute.xlu0 %1368
        %1370 = vrot.lane.b32.xlu0 %v596, 72
        %v1371 = vpop.permute.xlu0 %1370
        %v1372 = vsel %vm636, %v1367, 0
        %v1374 = vsel %vm636, %v1369, 0
        %v1376 = vsel %vm636, %v1371, 0
        %1378 = vmatprep.subr.mxu0 0.0
        %1379 = vmatpush1.xpose.msra.mxu0 %v1374
        %1380 = vmatprep.subr.mxu0 0.0
        %1381 = vmatpush1.xpose.msra.mxu0 %v1376
        %1382 = vmatprep.subr.mxu0 0.0
        %1383 = vmatpush1.xpose.msra.mxu0 0.0
        %1384 = vmatprep.subr.mxu0 0.0
        %1385 = vmatpush1.xpose.msra.mxu0 0.0
        %1386 = vmatprep.subr.mxu0 0.0
        %1387 = vmatpush1.xpose.msra.mxu0 0.0
        %1388 = vmatprep.subr.mxu0 0.0
        %1389 = vmatpush1.xpose.msra.mxu0 0.0
        %1390 = vmatprep.subr.mxu0 0.0
        %1391 = vmatpush1.xpose.msra.mxu0 0.0
        %1392 = vmatprep.subr.mxu0 0.0
        %1393 = vmatpush1.xpose.msra.mxu0 0.0
        %1394 = vmatprep.subr.mxu0 0.0
        %1395 = vmatpush1.xpose.msra.mxu0 0.0
        %1396 = vmatprep.subr.mxu0 0.0
        %1397 = vmatpush1.xpose.msra.mxu0 0.0
        %1398 = vmatprep.subr.mxu0 0.0
        %1399 = vmatpush1.xpose.msra.mxu0 0.0
        %1400 = vmatprep.subr.mxu0 0.0
        %1401 = vmatpush1.xpose.msra.mxu0 0.0
        %1402 = vmatprep.subr.mxu0 0.0
        %1403 = vmatpush1.xpose.msra.mxu0 0.0
        %1404 = vmatprep.subr.mxu0 0.0
        %1405 = vmatpush1.xpose.msra.mxu0 0.0
        %1406 = vmatprep.subr.mxu0 0.0
        %1407 = vmatpush1.xpose.msra.mxu0 0.0
        %1408 = vmatprep.subr.mxu0 0.0
        %1409 = vmatpush1.xpose.msra.mxu0 0.0
        %1410 = vmatprep.subr.mxu0 0.0
        %1411 = vmatpush1.xpose.msra.mxu0 0.0
        %1412 = vmatprep.subr.mxu0 0.0
        %1413 = vmatpush1.xpose.msra.mxu0 0.0
        %1414 = vmatprep.subr.mxu0 0.0
        %1415 = vmatpush1.xpose.msra.mxu0 0.0
        %1416 = vmatprep.subr.mxu0 0.0
        %1417 = vmatpush1.xpose.msra.mxu0 0.0
        %1418 = vmatprep.subr.mxu0 0.0
        %1419 = vmatpush1.xpose.msra.mxu0 0.0
        %1420 = vmatprep.subr.mxu0 0.0
        %1421 = vmatpush1.xpose.msra.mxu0 0.0
        %1422 = vmatprep.subr.mxu0 0.0
        %1423 = vmatpush1.xpose.msra.mxu0 0.0
        %1424 = vmatprep.subr.mxu0 0.0
        %1425 = vmatpush1.xpose.msra.mxu0 0.0
        %1426 = vmatprep.subr.mxu0 0.0
        %1427 = vmatpush1.xpose.msra.mxu0 0.0
        %1428 = vmatprep.subr.mxu0 0.0
        %1429 = vmatpush1.xpose.msra.mxu0 0.0
        %1430 = vmatprep.subr.mxu0 0.0
        %1431 = vmatpush1.xpose.msra.mxu0 0.0
        %1432 = vmatprep.subr.mxu0 0.0
        %1433 = vmatpush1.xpose.msra.mxu0 0.0
        %1434 = vmatprep.subr.mxu0 0.0
        %1435 = vmatpush1.xpose.msra.mxu0 0.0
        %1436 = vmatprep.subr.mxu0 0.0
        %1437 = vmatpush1.xpose.msra.mxu0 0.0
        %1438 = vmatprep.subr.mxu0 0.0
        %1439 = vmatpush1.xpose.msra.mxu0 0.0
        %1440 = vmatprep.subr.mxu0 0.0
        %1441 = vmatpush1.xpose.msra.mxu0 0.0
        %1442 = vmatprep.mubr.f32.mxu0 0.0
        %1443 = vmatmul.mubr.f32.gmra.mrb[0].mxu0 %v1372
        %v1444 = vpop.f32.mrb[0].mxu0
        %v1445 = vadd.f32 %v634, %v1444
        %v1446 = vpop.f32.mrb[0].mxu0
        %1447 = vdwg.mxu0
        %v1448 = vsel %vm714, %v1445, -inf
        %1449 = vmax.xlane.f32.xlu0 %v1448
        %v1450 = vpop.xlane.xlu0 %1449
        %v1451 = vsub.f32 %v1445, %v1450
        %v1452 = vmul.f32 %v1451, 1.442695
        %v1453 = vpow.pop %v1452
        %v1454 = vsel %vm714, %v1453, 0.0
        %1455 = vadd.xlane.f32.xlu0 %v1454
        %v1456 = vpop.xlane.xlu0 %1455
        %v1457 = vrcp.pop %v1456
        %v1458 = vmul.f32 %v1453, %v1457
        %1459 = vrot.lane.b32.xlu0 %v601, 40
        %v1460 = vpop.permute.xlu0 %1459
        %1461 = vrot.lane.b32.xlu0 %v606, 40
        %v1462 = vpop.permute.xlu0 %1461
        %v1466 = vsel %vm714, %v1458, 0
        %1468 = vmatprep.subr.mxu0 0.0
        %1469 = vmatpush1.msra.mxu0 %v1460
        %1470 = vmatprep.subr.mxu0 0.0
        %1471 = vmatpush1.msra.mxu0 %v1462
        %1472 = vmatprep.subr.mxu0 0.0
        %1473 = vmatpush1.msra.mxu0 0.0
        %1474 = vmatprep.subr.mxu0 0.0
        %1475 = vmatpush1.msra.mxu0 0.0
        %1476 = vmatprep.subr.mxu0 0.0
        %1477 = vmatpush1.msra.mxu0 0.0
        %1478 = vmatprep.subr.mxu0 0.0
        %1479 = vmatpush1.msra.mxu0 0.0
        %1480 = vmatprep.subr.mxu0 0.0
        %1481 = vmatpush1.msra.mxu0 0.0
        %1482 = vmatprep.subr.mxu0 0.0
        %1483 = vmatpush1.msra.mxu0 0.0
        %1484 = vmatprep.subr.mxu0 0.0
        %1485 = vmatpush1.msra.mxu0 0.0
        %1486 = vmatprep.subr.mxu0 0.0
        %1487 = vmatpush1.msra.mxu0 0.0
        %1488 = vmatprep.subr.mxu0 0.0
        %1489 = vmatpush1.msra.mxu0 0.0
        %1490 = vmatprep.subr.mxu0 0.0
        %1491 = vmatpush1.msra.mxu0 0.0
        %1492 = vmatprep.subr.mxu0 0.0
        %1493 = vmatpush1.msra.mxu0 0.0
        %1494 = vmatprep.subr.mxu0 0.0
        %1495 = vmatpush1.msra.mxu0 0.0
        %1496 = vmatprep.subr.mxu0 0.0
        %1497 = vmatpush1.msra.mxu0 0.0
        %1498 = vmatprep.subr.mxu0 0.0
        %1499 = vmatpush1.msra.mxu0 0.0
        %1500 = vmatprep.subr.mxu0 0.0
        %1501 = vmatpush1.msra.mxu0 0.0
        %1502 = vmatprep.subr.mxu0 0.0
        %1503 = vmatpush1.msra.mxu0 0.0
        %1504 = vmatprep.subr.mxu0 0.0
        %1505 = vmatpush1.msra.mxu0 0.0
        %1506 = vmatprep.subr.mxu0 0.0
        %1507 = vmatpush1.msra.mxu0 0.0
        %1508 = vmatprep.subr.mxu0 0.0
        %1509 = vmatpush1.msra.mxu0 0.0
        %1510 = vmatprep.subr.mxu0 0.0
        %1511 = vmatpush1.msra.mxu0 0.0
        %1512 = vmatprep.subr.mxu0 0.0
        %1513 = vmatpush1.msra.mxu0 0.0
        %1514 = vmatprep.subr.mxu0 0.0
        %1515 = vmatpush1.msra.mxu0 0.0
        %1516 = vmatprep.subr.mxu0 0.0
        %1517 = vmatpush1.msra.mxu0 0.0
        %1518 = vmatprep.subr.mxu0 0.0
        %1519 = vmatpush1.msra.mxu0 0.0
        %1520 = vmatprep.subr.mxu0 0.0
        %1521 = vmatpush1.msra.mxu0 0.0
        %1522 = vmatprep.subr.mxu0 0.0
        %1523 = vmatpush1.msra.mxu0 0.0
        %1524 = vmatprep.subr.mxu0 0.0
        %1525 = vmatpush1.msra.mxu0 0.0
        %1526 = vmatprep.subr.mxu0 0.0
        %1527 = vmatpush1.msra.mxu0 0.0
        %1528 = vmatprep.subr.mxu0 0.0
        %1529 = vmatpush1.msra.mxu0 0.0
        %1530 = vmatprep.subr.mxu0 0.0
        %1531 = vmatpush1.msra.mxu0 0.0
        %1532 = vmatprep.mubr.f32.mxu0 0.0
        %1533 = vmatmul.mubr.f32.gmra.mrb[0].mxu0 %v1466
        %v1534 = vpop.f32.mrb[0].mxu0
        %v1535 = vadd.f32 0.0, %v1534
        %v1536 = vpop.f32.mrb[0].mxu0
        %1537 = vdwg.mxu0
        %v1538 = vld [vmem:[#allocation13 + $0x18] sm:$0xff]
        %v1540 = vsel %vm636, %v1535, 0
        %1542 = vmatprep.subr.mxu0 0.0
        %1543 = vmatpush1.msra.mxu0 %v1538
        %1544 = vmatprep.subr.mxu0 0.0
        %1545 = vmatpush1.msra.mxu0 0.0
        %1546 = vmatprep.subr.mxu0 0.0
        %1547 = vmatpush1.msra.mxu0 0.0
        %1548 = vmatprep.subr.mxu0 0.0
        %1549 = vmatpush1.msra.mxu0 0.0
        %1550 = vmatprep.subr.mxu0 0.0
        %1551 = vmatpush1.msra.mxu0 0.0
        %1552 = vmatprep.subr.mxu0 0.0
        %1553 = vmatpush1.msra.mxu0 0.0
        %1554 = vmatprep.subr.mxu0 0.0
        %1555 = vmatpush1.msra.mxu0 0.0
        %1556 = vmatprep.subr.mxu0 0.0
        %1557 = vmatpush1.msra.mxu0 0.0
        %1558 = vmatprep.subr.mxu0 0.0
        %1559 = vmatpush1.msra.mxu0 0.0
        %1560 = vmatprep.subr.mxu0 0.0
        %1561 = vmatpush1.msra.mxu0 0.0
        %1562 = vmatprep.subr.mxu0 0.0
        %1563 = vmatpush1.msra.mxu0 0.0
        %1564 = vmatprep.subr.mxu0 0.0
        %1565 = vmatpush1.msra.mxu0 0.0
        %1566 = vmatprep.subr.mxu0 0.0
        %1567 = vmatpush1.msra.mxu0 0.0
        %1568 = vmatprep.subr.mxu0 0.0
        %1569 = vmatpush1.msra.mxu0 0.0
        %1570 = vmatprep.subr.mxu0 0.0
        %1571 = vmatpush1.msra.mxu0 0.0
        %1572 = vmatprep.subr.mxu0 0.0
        %1573 = vmatpush1.msra.mxu0 0.0
        %1574 = vmatprep.subr.mxu0 0.0
        %1575 = vmatpush1.msra.mxu0 0.0
        %1576 = vmatprep.subr.mxu0 0.0
        %1577 = vmatpush1.msra.mxu0 0.0
        %1578 = vmatprep.subr.mxu0 0.0
        %1579 = vmatpush1.msra.mxu0 0.0
        %1580 = vmatprep.subr.mxu0 0.0
        %1581 = vmatpush1.msra.mxu0 0.0
        %1582 = vmatprep.subr.mxu0 0.0
        %1583 = vmatpush1.msra.mxu0 0.0
        %1584 = vmatprep.subr.mxu0 0.0
        %1585 = vmatpush1.msra.mxu0 0.0
        %1586 = vmatprep.subr.mxu0 0.0
        %1587 = vmatpush1.msra.mxu0 0.0
        %1588 = vmatprep.subr.mxu0 0.0
        %1589 = vmatpush1.msra.mxu0 0.0
        %1590 = vmatprep.subr.mxu0 0.0
        %1591 = vmatpush1.msra.mxu0 0.0
        %1592 = vmatprep.subr.mxu0 0.0
        %1593 = vmatpush1.msra.mxu0 0.0
        %1594 = vmatprep.subr.mxu0 0.0
        %1595 = vmatpush1.msra.mxu0 0.0
        %1596 = vmatprep.subr.mxu0 0.0
        %1597 = vmatpush1.msra.mxu0 0.0
        %1598 = vmatprep.subr.mxu0 0.0
        %1599 = vmatpush1.msra.mxu0 0.0
        %1600 = vmatprep.subr.mxu0 0.0
        %1601 = vmatpush1.msra.mxu0 0.0
        %1602 = vmatprep.subr.mxu0 0.0
        %1603 = vmatpush1.msra.mxu0 0.0
        %1604 = vmatprep.subr.mxu0 0.0
        %1605 = vmatpush1.msra.mxu0 0.0
        %1606 = vmatprep.mubr.f32.mxu0 0.0
        %1607 = vmatmul.mubr.f32.gmra.mrb[0].mxu0 %v1540
        %v1608 = vpop.f32.mrb[0].mxu0
        %v1609 = vadd.f32 0.0, %v1608
        %v1610 = vpop.f32.mrb[0].mxu0
        %1611 = vdwg.mxu0
        %v1612 = vadd.f32 %v1365, %v1609
        %v1613 = vld [vmem:[%s7] sm:$0x1]
        %v1615 = vlaneseq
        %v1616 = vshrl.u32 %v1615, 7
        %v1617 = vsub.s32 0, %v1616
        %v1618 = vrot.slane %v1613, %v1617
        %v1620 = vadd.f32 %v1612, %v1618
        %1621 = vst.msk [vmem:[%s462] sm:$0xff] %vm478, %v1620
        %s1622 = sand.u32 %s209, 1
        %s1623 = scalar_lea.sflag [#allocation7], %s1622
        %s1624 = sand.u32 %s209, 1
        %s1625 = smul.addr %s1624, 8
        %s1626 = scalar_lea.vmem [#allocation14], %s1625
        %s1627 = sand.u32 %s39, 1
        %s1628 = scalar_lea.sflag [#allocation16], %s1627
        %s1629 = sand.u32 %s235, 1
        %s1630 = smul.addr %s1629, 16
        %s1631 = scalar_lea.vmem [#allocation15], %s1630
        %s1632 = sand.u32 %s39, 1
        %s1633 = scalar_lea.sflag [#allocation16], %s1632
        %s1634 = sand.u32 %s261, 1
        %s1635 = smul.addr %s1634, 16
        %s1636 = scalar_lea.vmem [#allocation17], %s1635
        // Predicated region
        $region69: #{tpu_custom_call.1} parent=47 // pred_check
          %p1637 = pneg %p219
        $region70: #{tpu_custom_call.1} parent=47 // pred_check_branch
          %1639 = sbr.rel (%p1637) target = $region72
        $region71: #{tpu_custom_call.1} parent=47 // pred_region
          %s1641 = ssub.s32 128, 128
          %1642 = vsyncadd %s1623, %s1641
          %s1643 = smul.addr %s39, 128
          %s1644 = scalar_lea.hbm %s8, %s1643
          %s1646 = sshll.u32 %s1626, 4
          %s1647 = int_to_ptr.vmem [resolvable:$true] %s1646
          %1649 = dma.vmem_to_hbm [thread:$0]  %s1647, 128, %s1644, %s1623
        $region72: #{tpu_custom_call.1} parent=47 // pred_fallthru
          _
        // Predicated region
        $region73: #{tpu_custom_call.1} parent=47 // pred_check
          %p1650 = pneg %p245
        $region74: #{tpu_custom_call.1} parent=47 // pred_check_branch
          %1652 = sbr.rel (%p1650) target = $region76
        $region75: #{tpu_custom_call.1} parent=47 // pred_region
          %s1654 = ssub.s32 256, 256
          %1655 = vsyncadd %s1628, %s1654
          %s1656 = smul.addr %s39, 2
          %s1657 = smul.addr %s1656, 128
          %s1658 = scalar_lea.hbm %s9, %s1657
          %s1659 = sshll.u32 %s1631, 4
          %s1660 = int_to_ptr.vmem [resolvable:$true] %s1659
          %1665 = dma.vmem_to_hbm [thread:$0]  %s1660, 256, %s1658, %s1628, 128, 128, 8
        $region76: #{tpu_custom_call.1} parent=47 // pred_fallthru
          _
        // Predicated region
        $region77: #{tpu_custom_call.1} parent=47 // pred_check
          %p1666 = pneg %p271
        $region78: #{tpu_custom_call.1} parent=47 // pred_check_branch
          %1668 = sbr.rel (%p1666) target = $region80
        $region79: #{tpu_custom_call.1} parent=47 // pred_region
          %s1670 = ssub.s32 256, 256
          %1671 = vsyncadd %s1633, %s1670
          %s1672 = smul.addr %s39, 2
          %s1673 = smul.addr %s1672, 128
          %s1674 = scalar_lea.hbm %s10, %s1673
          %s1675 = sshll.u32 %s1636, 4
          %s1676 = int_to_ptr.vmem [resolvable:$true] %s1675
          %1681 = dma.vmem_to_hbm [thread:$0]  %s1676, 256, %s1674, %s1633, 128, 128, 8
        $region80: #{tpu_custom_call.1} parent=47 // pred_fallthru
          _
      $region48: #{tpu_custom_call.1} parent=5 // pred_fallthru
        _
      %p1682 = scmp.le.s32.totalorder 2, %s34
      // Predicated region
      $region81: #{tpu_custom_call.1} parent=5 // pred_check
        %p1683 = pneg %p1682
      $region82: #{tpu_custom_call.1} parent=5 // pred_check_branch
        %1685 = sbr.rel (%p1683) target = $region84
      $region83: #{tpu_custom_call.1} parent=5 // pred_region
        %s1686 = ssub.s32 %s34, 2
        // Predicated region
        $region85: #{tpu_custom_call.1} parent=83 // pred_check
          %p1687 = pneg %p225
        $region86: #{tpu_custom_call.1} parent=83 // pred_check_branch
          %1689 = sbr.rel (%p1687) target = $region88
        $region87: #{tpu_custom_call.1} parent=83 // pred_region
          %s1690 = sand.u32 %s210, 1
          %s1691 = scalar_lea.sflag [#allocation7], %s1690
          %s1692 = sand.u32 %s210, 1
          %s1693 = smul.addr %s1692, 8
          %s1694 = scalar_lea.vmem [#allocation14], %s1693
          %1695 = dma.done %s1691, 128
        $region88: #{tpu_custom_call.1} parent=83 // pred_fallthru
          _
        // Predicated region
        $region89: #{tpu_custom_call.1} parent=83 // pred_check
          %p1696 = pneg %p251
        $region90: #{tpu_custom_call.1} parent=83 // pred_check_branch
          %1698 = sbr.rel (%p1696) target = $region92
        $region91: #{tpu_custom_call.1} parent=83 // pred_region
          %s1699 = sand.u32 %s40, 1
          %s1700 = scalar_lea.sflag [#allocation16], %s1699
          %s1701 = sand.u32 %s236, 1
          %s1702 = smul.addr %s1701, 16
          %s1703 = scalar_lea.vmem [#allocation15], %s1702
          %1704 = dma.done %s1700, 256
        $region92: #{tpu_custom_call.1} parent=83 // pred_fallthru
          _
        // Predicated region
        $region93: #{tpu_custom_call.1} parent=83 // pred_check
          %p1705 = pneg %p277
        $region94: #{tpu_custom_call.1} parent=83 // pred_check_branch
          %1707 = sbr.rel (%p1705) target = $region96
        $region95: #{tpu_custom_call.1} parent=83 // pred_region
          %s1708 = sand.u32 %s40, 1
          %s1709 = scalar_lea.sflag [#allocation16], %s1708
          %s1710 = sand.u32 %s262, 1
          %s1711 = smul.addr %s1710, 16
          %s1712 = scalar_lea.vmem [#allocation17], %s1711
          %1713 = dma.done %s1709, 256
        $region96: #{tpu_custom_call.1} parent=83 // pred_fallthru
          _
      $region84: #{tpu_custom_call.1} parent=5 // pred_fallthru
        _
    $region6: #{tpu_custom_call.1} parent=1 // loop_footer
      %s38 = sadd.s32 1, %s34
    $region7: #{tpu_custom_call.1} parent=1 // loop_footer_branch
      %33 = sbr.rel target = $region3
    $region8: #{tpu_custom_call.1} parent=1 // loop_exit
      _
    %1714 = vsyncpa [#allocation6], 1
    %s1715 = scalar_lea.sflag [#allocation6], 1
    %1716 = vsyncpa %s1715, 1
    %1717 = vsyncpa [#allocation9], 1
    %s1718 = scalar_lea.sflag [#allocation9], 1
    %1719 = vsyncpa %s1718, 1
    %1720 = vsyncpa [#allocation12], 1
    %1721 = vsyncpa [#allocation7], 1
    %s1722 = scalar_lea.sflag [#allocation7], 1
    %1723 = vsyncpa %s1722, 1
    %1724 = vsyncpa [#allocation16], 1
    %s1725 = scalar_lea.sflag [#allocation16], 1
    %1726 = vsyncpa %s1725, 1

</llo_original>
